<compile_context>
chip_gen: v7x
topology: tpu7x:2x2x1
jax: 0.10.0
libtpu: 0.0.40
codegen_flags: <defaults>
</compile_context>

<pallas_src>
import functools

import jax
import jax.numpy as jnp
from jax import lax
from jax.experimental import pallas as pl
from jax.experimental.pallas import tpu as pltpu


# ------------------------------------------------------------------
# Fused Pallas kernel: expand 1x1 -> depthwise 3x3 -> project 1x1 (+ residual)
# ------------------------------------------------------------------
def _fused_block_kernel(*refs, H, W, stride, shortcut):
    if shortcut:
        (x_ref, w1_ref, b1_ref, w2_ref, b2_ref, w3t_ref, b3_ref,
         r_ref, o_ref, epad_ref) = refs
    else:
        (x_ref, w1_ref, b1_ref, w2_ref, b2_ref, w3t_ref, b3_ref,
         o_ref, epad_ref) = refs
        r_ref = None

    Cexp = w1_ref.shape[1]
    Ho = (H + 2 - 3) // stride + 1
    Wo = (W + 2 - 3) // stride + 1

    # ---- stage 1: expand 1x1 conv (BN scale pre-folded into w1) + bias + ReLU6 ----
    x_mc = x_ref[...]                                      # (H*W, Cin), channels on lanes
    e = jnp.dot(x_mc, w1_ref[...], preferred_element_type=jnp.float32)
    e = jnp.clip(e + b1_ref[...], 0.0, 6.0)                # (H*W, Cexp)

    # ---- stash expanded activation in a zero-padded VMEM scratch (halo = padding=1).
    #      Only leading-axis (row) stores -> no unaligned minor-dim writes.
    zrow = jnp.zeros((1, W + 2, Cexp), jnp.float32)
    zcol = jnp.zeros((H, 1, Cexp), jnp.float32)
    epad_ref[0:1] = zrow
    epad_ref[H + 1:H + 2] = zrow
    epad_ref[1:H + 1] = jnp.concatenate(
        [zcol, e.reshape(H, W, Cexp), zcol], axis=1)       # (H, W+2, Cexp)

    # ---- stages 2+3: depthwise 3x3 + bias + ReLU6, then project 1x1 + bias (+ res).
    #      Row-chunked so the accumulator stays register-resident and each chunk ends in
    #      exactly one lane-dense (Cout, chunk*Wo) store.
    w2 = w2_ref[...]                                       # (3, 3, Cexp), loaded once
    taps = [w2[di, dj, :] for di in range(3) for dj in range(3)]   # hoisted broadcasts
    b2 = b2_ref[...].reshape(1, 1, Cexp)
    w3t = w3t_ref[...]                                     # (Cout, Cexp)
    b3 = b3_ref[...]                                       # (Cout, 1)

    HB = max(1, min(Ho, 128 // min(Wo, 128)))              # rows/chunk -> ~128-lane slabs
    for h0 in range(0, Ho, HB):
        hb = min(HB, Ho - h0)
        acc = jnp.zeros((hb, Wo, Cexp), jnp.float32)
        for di in range(3):
            for dj in range(3):
                if stride == 1:
                    patch = epad_ref[h0 + di:h0 + di + hb, dj:dj + Wo, :]
                else:
                    # TODO(synk): stride-2 (downsample) strided-ref read is untested here.
                    patch = epad_ref[pl.ds(h0 * stride + di, hb, stride=stride),
                                     pl.ds(dj, Wo, stride=stride), :]
                acc = acc + patch * taps[di * 3 + dj]
        d2 = jnp.clip(acc + b2, 0.0, 6.0).reshape(hb * Wo, Cexp)

        # project: (Cout, Cexp) x (chunk, Cexp)^T -> (Cout, chunk)  [lane-dense output]
        p = lax.dot_general(w3t, d2, (((1,), (1,)), ((), ())),
                            preferred_element_type=jnp.float32)
        p = p + b3
        m0 = h0 * Wo
        if r_ref is not None:
            p = p + r_ref[:, m0:m0 + hb * Wo]              # residual, NCHW-flat, f32
        o_ref[:, m0:m0 + hb * Wo] = p.astype(o_ref.dtype)


# ------------------------------------------------------------------
# BaseBlock forward (wrapper: BN folding, layout plumbing, one pallas_call)
# ------------------------------------------------------------------
def base_block_forward(x_nchw, p, stride=1):
    N, Cin, H, W = x_nchw.shape
    Cexp = p["w1"].shape[1]
    Cout = p["w3"].shape[1]
    shortcut = (stride == 1) and (Cin == Cout)
    Ho = (H + 2 - 3) // stride + 1
    Wo = (W + 2 - 3) // stride + 1
    M, Mo = H * W, Ho * Wo

    x = x_nchw.astype(jnp.float32)
    # NHWC-flat view feeding the expand matmul (channels map to lanes inside the kernel).
    x_mc = jnp.transpose(x, (0, 2, 3, 1)).reshape(N, M, Cin)

    # Fold (inference-mode) BN scales into the conv weights; only biases stay in-kernel.
    w1s = (p["w1"] * p["s1"][None, :]).astype(jnp.float32)          # (Cin, Cexp)
    w2s = (p["w2"] * p["s2"][None, None, :]).astype(jnp.float32)    # (3, 3, Cexp)
    w3t = (p["w3"] * p["s3"][None, :]).T.astype(jnp.float32)        # (Cout, Cexp)
    b1 = p["b1"].reshape(1, Cexp).astype(jnp.float32)
    b2 = p["b2"].reshape(1, Cexp).astype(jnp.float32)
    b3 = p["b3"].reshape(Cout, 1).astype(jnp.float32)

    args = [x_mc, w1s, b1, w2s, b2, w3t, b3]
    in_specs = [
        pl.BlockSpec((None, M, Cin), lambda n: (n, 0, 0)),
        pl.BlockSpec((Cin, Cexp), lambda n: (0, 0)),
        pl.BlockSpec((1, Cexp), lambda n: (0, 0)),
        pl.BlockSpec((3, 3, Cexp), lambda n: (0, 0, 0)),
        pl.BlockSpec((1, Cexp), lambda n: (0, 0)),
        pl.BlockSpec((Cout, Cexp), lambda n: (0, 0)),
        pl.BlockSpec((Cout, 1), lambda n: (0, 0)),
    ]
    if shortcut:
        args.append(x.reshape(N, Cin, M))           # NCHW-flat residual (free reshape)
        in_specs.append(pl.BlockSpec((None, Cin, M), lambda n: (n, 0, 0)))

    kernel = functools.partial(_fused_block_kernel, H=H, W=W, stride=stride,
                               shortcut=shortcut)
    flops = 2 * N * (M * Cin * Cexp + 9 * Mo * Cexp + Mo * Cexp * Cout)
    bytes_accessed = 4 * (N * M * Cin * (2 if shortcut else 1) + N * Cout * Mo
                          + w1s.size + w2s.size + w3t.size + 2 * Cexp + Cout)

    y = pl.pallas_call(
        kernel,
        out_shape=jax.ShapeDtypeStruct((N, Cout, Mo), jnp.float32),
        grid=(N,),
        in_specs=in_specs,
        out_specs=pl.BlockSpec((None, Cout, Mo), lambda n: (n, 0, 0)),
        scratch_shapes=[pltpu.VMEM((H + 2, W + 2, Cexp), jnp.float32)],
        compiler_params=pltpu.CompilerParams(
            dimension_semantics=("parallel",),
            vmem_limit_bytes=32 * 1024 * 1024),
        cost_estimate=pl.CostEstimate(flops=flops, transcendentals=0,
                                      bytes_accessed=bytes_accessed),
    )(*args)
    # NCHW-flat -> NCHW: a free reshape (no transpose needed at all).
    return y.reshape(N, Cout, Ho, Wo)


# ------------------------------------------------------------------
# Deterministic parameter init (shapes from the PyTorch module __init__)
# ------------------------------------------------------------------
def init_params(key, cin, cout, t=6):
    c = t * cin
    ks = jax.random.split(key, 15)

    def folded_bn(kg, kb, km, kv, n):
        gamma = jax.random.uniform(kg, (n,), minval=0.5, maxval=1.5)
        beta = 0.1 * jax.random.normal(kb, (n,))
        mean = 0.1 * jax.random.normal(km, (n,))
        var = jax.random.uniform(kv, (n,), minval=0.5, maxval=1.5)
        eps = 1e-5
        scale = gamma / jnp.sqrt(var + eps)
        bias = beta - mean * scale
        return scale.astype(jnp.float32), bias.astype(jnp.float32)

    w1 = 0.3 * jax.random.normal(ks[0], (cin, c), jnp.float32)   # conv1 (c,cin,1,1) -> (cin,c)
    w2 = 0.3 * jax.random.normal(ks[1], (3, 3, c), jnp.float32)  # conv2 (c,1,3,3)   -> (3,3,c)
    w3 = 0.3 * jax.random.normal(ks[2], (c, cout), jnp.float32)  # conv3 (cout,c,1,1)-> (c,cout)
    s1, b1 = folded_bn(ks[3], ks[4], ks[5], ks[6], c)
    s2, b2 = folded_bn(ks[7], ks[8], ks[9], ks[10], c)
    s3, b3 = folded_bn(ks[11], ks[12], ks[13], ks[14], cout)
    return dict(w1=w1, w2=w2, w3=w3, s1=s1, b1=b1, s2=s2, b2=b2, s3=s3, b3=b3)


# ------------------------------------------------------------------
# Pure-JAX reference (correctness check)
# ------------------------------------------------------------------
def reference_forward(x_nchw, p, stride=1):
    N, Cin, H, W = x_nchw.shape
    Cout = p["w3"].shape[1]
    shortcut = (stride == 1) and (Cin == Cout)
    hi = jax.lax.Precision.HIGHEST

    x = jnp.transpose(x_nchw, (0, 2, 3, 1)).astype(jnp.float32)
    y = jnp.einsum("nhwi,io->nhwo", x, p["w1"], precision=hi)
    y = jnp.clip(y * p["s1"] + p["b1"], 0.0, 6.0)

    yp = jnp.pad(y, ((0, 0), (1, 1), (1, 1), (0, 0)))
    Ho = (H + 2 - 3) // stride + 1
    Wo = (W + 2 - 3) // stride + 1
    acc = jnp.zeros((N, Ho, Wo, y.shape[-1]), jnp.float32)
    for di in range(3):
        for dj in range(3):
            patch = yp[:, di:di + (Ho - 1) * stride + 1:stride,
                       dj:dj + (Wo - 1) * stride + 1:stride, :]
            acc = acc + patch * p["w2"][di, dj, :]
    y = jnp.clip(acc * p["s2"] + p["b2"], 0.0, 6.0)

    y = jnp.einsum("nhwc,co->nhwo", y, p["w3"], precision=hi)
    y = y * p["s3"] + p["b3"]
    if shortcut:
        y = y + x
    return jnp.transpose(y, (0, 3, 1, 2))


if __name__ == "__main__":
    key = jax.random.PRNGKey(0)
    kx, kp = jax.random.split(key)

    N, Cin, H, W = 2, 4, 16, 16
    Cout, t = 4, 6                     # same in/out channels, no downsample -> shortcut
    x = jax.random.normal(kx, (N, Cin, H, W), jnp.float32)
    params = init_params(kp, Cin, Cout, t=t)

    fwd = jax.jit(base_block_forward, static_argnames=("stride",))
    out = jax.block_until_ready(fwd(x, params, stride=1))

    ref = reference_forward(x, params, stride=1)
    assert out.shape == (N, Cout, H, W)
    assert jnp.allclose(out, ref, atol=2e-3, rtol=2e-3), (
        float(jnp.max(jnp.abs(out - ref))))

    print("KERNEL_OK")
</pallas_src>

<mosaic_0001>
module attributes {stable_mosaic.version = 11 : i64} {
  func.func @_fused_block_kernel(%arg0: i32, %arg1: memref<1x256x4xf32, #tpu.memory_space<vmem>>, %arg2: memref<4x24xf32, #tpu.memory_space<vmem>>, %arg3: memref<1x24xf32, #tpu.memory_space<vmem>>, %arg4: memref<3x3x24xf32, #tpu.memory_space<vmem>>, %arg5: memref<1x24xf32, #tpu.memory_space<vmem>>, %arg6: memref<4x24xf32, #tpu.memory_space<vmem>>, %arg7: memref<4x1xf32, #tpu.memory_space<vmem>>, %arg8: memref<1x4x256xf32, #tpu.memory_space<vmem>>, %arg9: memref<1x4x256xf32, #tpu.memory_space<vmem>>, %arg10: memref<18x18x24xf32, #tpu.memory_space<vmem>>) attributes {dimension_semantics = [#tpu.dimension_semantics<parallel>], iteration_bounds = array<i64: 2>, scalar_prefetch = 0 : i64, scratch_operands = 1 : i64, tpu.core_type = #tpu.core_type<tc>, window_params = [{transform_indices = @transform_0, window_bounds = array<i64: 1, 256, 4>}, {pipeline_mode = #tpu.pipeline_mode<synchronous>, transform_indices = @transform_1, window_bounds = array<i64: 4, 24>}, {pipeline_mode = #tpu.pipeline_mode<synchronous>, transform_indices = @transform_2, window_bounds = array<i64: 1, 24>}, {pipeline_mode = #tpu.pipeline_mode<synchronous>, transform_indices = @transform_3, window_bounds = array<i64: 3, 3, 24>}, {pipeline_mode = #tpu.pipeline_mode<synchronous>, transform_indices = @transform_4, window_bounds = array<i64: 1, 24>}, {pipeline_mode = #tpu.pipeline_mode<synchronous>, transform_indices = @transform_5, window_bounds = array<i64: 4, 24>}, {pipeline_mode = #tpu.pipeline_mode<synchronous>, transform_indices = @transform_6, window_bounds = array<i64: 4, 1>}, {transform_indices = @transform_7, window_bounds = array<i64: 1, 4, 256>}, {transform_indices = @transform_8, window_bounds = array<i64: 1, 4, 256>}]} {
    %c0 = arith.constant 0 : index
    %c0_0 = arith.constant 0 : index
    %c0_1 = arith.constant 0 : index
    %0 = vector.load %arg1[%c0, %c0_0, %c0_1] : memref<1x256x4xf32, #tpu.memory_space<vmem>>, vector<1x256x4xf32>
    %1 = vector.shape_cast %0 : vector<1x256x4xf32> to vector<256x4xf32>
    %c0_2 = arith.constant 0 : index
    %c0_3 = arith.constant 0 : index
    %2 = vector.load %arg2[%c0_2, %c0_3] : memref<4x24xf32, #tpu.memory_space<vmem>>, vector<4x24xf32>
    %cst = arith.constant dense<0.000000e+00> : vector<256x24xf32>
    %3 = tpu.matmul %1, %2, %cst {dimension_numbers = #tpu.dot_dimension_numbers<[1], [0], [0], [1], [0, 0, 1, 1], [], []>} : vector<256x4xf32>, vector<4x24xf32>, vector<256x24xf32> -> vector<256x24xf32>
    %c0_4 = arith.constant 0 : index
    %c0_5 = arith.constant 0 : index
    %4 = vector.load %arg3[%c0_4, %c0_5] : memref<1x24xf32, #tpu.memory_space<vmem>>, vector<1x24xf32>
    %5 = vector.broadcast %4 : vector<1x24xf32> to vector<256x24xf32>
    %6 = arith.addf %3, %5 : vector<256x24xf32>
    %cst_6 = arith.constant 0.000000e+00 : f32
    %cst_7 = arith.constant 6.000000e+00 : f32
    %7 = vector.broadcast %cst_6 : f32 to vector<256x24xf32>
    %8 = arith.maximumf %7, %6 : vector<256x24xf32>
    %9 = vector.broadcast %cst_7 : f32 to vector<256x24xf32>
    %10 = arith.minimumf %9, %8 : vector<256x24xf32>
    %cst_8 = arith.constant 0.000000e+00 : f32
    %11 = vector.broadcast %cst_8 : f32 to vector<1x18x24xf32>
    %cst_9 = arith.constant 0.000000e+00 : f32
    %12 = vector.broadcast %cst_9 : f32 to vector<16x1x24xf32>
    %c0_10 = arith.constant 0 : index
    %c0_11 = arith.constant 0 : index
    %c0_12 = arith.constant 0 : index
    %13 = vector.load %arg10[%c0_10, %c0_11, %c0_12] : memref<18x18x24xf32, #tpu.memory_space<vmem>>, vector<1x18x24xf32>
    tpu.vector_store %arg10[%c0_10, %c0_11, %c0_12], %11 {strides = array<i32>} : memref<18x18x24xf32, #tpu.memory_space<vmem>>, vector<1x18x24xf32>,
    %c17 = arith.constant 17 : index
    %c0_13 = arith.constant 0 : index
    %c0_14 = arith.constant 0 : index
    %14 = vector.load %arg10[%c17, %c0_13, %c0_14] : memref<18x18x24xf32, #tpu.memory_space<vmem>>, vector<1x18x24xf32>
    tpu.vector_store %arg10[%c17, %c0_13, %c0_14], %11 {strides = array<i32>} : memref<18x18x24xf32, #tpu.memory_space<vmem>>, vector<1x18x24xf32>,
    %15 = vector.shape_cast %10 : vector<256x24xf32> to vector<16x16x24xf32>
    %16 = tpu.concatenate %12, %15, %12 in 1 : vector<16x1x24xf32>, vector<16x16x24xf32>, vector<16x1x24xf32> -> vector<16x18x24xf32>
    %c1 = arith.constant 1 : index
    %c0_15 = arith.constant 0 : index
    %c0_16 = arith.constant 0 : index
    %17 = vector.load %arg10[%c1, %c0_15, %c0_16] : memref<18x18x24xf32, #tpu.memory_space<vmem>>, vector<16x18x24xf32>
    tpu.vector_store %arg10[%c1, %c0_15, %c0_16], %16 {strides = array<i32>} : memref<18x18x24xf32, #tpu.memory_space<vmem>>, vector<16x18x24xf32>,
    %c0_17 = arith.constant 0 : index
    %c0_18 = arith.constant 0 : index
    %c0_19 = arith.constant 0 : index
    %18 = vector.load %arg4[%c0_17, %c0_18, %c0_19] : memref<3x3x24xf32, #tpu.memory_space<vmem>>, vector<3x3x24xf32>
    %19 = vector.extract_strided_slice %18 {offsets = [0, 0, 0], sizes = [1, 1, 24], strides = [1, 1, 1]} : vector<3x3x24xf32> to vector<1x1x24xf32>
    %20 = vector.shape_cast %19 : vector<1x1x24xf32> to vector<24xf32>
    %21 = vector.extract_strided_slice %18 {offsets = [0, 1, 0], sizes = [1, 1, 24], strides = [1, 1, 1]} : vector<3x3x24xf32> to vector<1x1x24xf32>
    %22 = vector.shape_cast %21 : vector<1x1x24xf32> to vector<24xf32>
    %23 = vector.extract_strided_slice %18 {offsets = [0, 2, 0], sizes = [1, 1, 24], strides = [1, 1, 1]} : vector<3x3x24xf32> to vector<1x1x24xf32>
    %24 = vector.shape_cast %23 : vector<1x1x24xf32> to vector<24xf32>
    %25 = vector.extract_strided_slice %18 {offsets = [1, 0, 0], sizes = [1, 1, 24], strides = [1, 1, 1]} : vector<3x3x24xf32> to vector<1x1x24xf32>
    %26 = vector.shape_cast %25 : vector<1x1x24xf32> to vector<24xf32>
    %27 = vector.extract_strided_slice %18 {offsets = [1, 1, 0], sizes = [1, 1, 24], strides = [1, 1, 1]} : vector<3x3x24xf32> to vector<1x1x24xf32>
    %28 = vector.shape_cast %27 : vector<1x1x24xf32> to vector<24xf32>
    %29 = vector.extract_strided_slice %18 {offsets = [1, 2, 0], sizes = [1, 1, 24], strides = [1, 1, 1]} : vector<3x3x24xf32> to vector<1x1x24xf32>
    %30 = vector.shape_cast %29 : vector<1x1x24xf32> to vector<24xf32>
    %31 = vector.extract_strided_slice %18 {offsets = [2, 0, 0], sizes = [1, 1, 24], strides = [1, 1, 1]} : vector<3x3x24xf32> to vector<1x1x24xf32>
    %32 = vector.shape_cast %31 : vector<1x1x24xf32> to vector<24xf32>
    %33 = vector.extract_strided_slice %18 {offsets = [2, 1, 0], sizes = [1, 1, 24], strides = [1, 1, 1]} : vector<3x3x24xf32> to vector<1x1x24xf32>
    %34 = vector.shape_cast %33 : vector<1x1x24xf32> to vector<24xf32>
    %35 = vector.extract_strided_slice %18 {offsets = [2, 2, 0], sizes = [1, 1, 24], strides = [1, 1, 1]} : vector<3x3x24xf32> to vector<1x1x24xf32>
    %36 = vector.shape_cast %35 : vector<1x1x24xf32> to vector<24xf32>
    %c0_20 = arith.constant 0 : index
    %c0_21 = arith.constant 0 : index
    %37 = vector.load %arg5[%c0_20, %c0_21] : memref<1x24xf32, #tpu.memory_space<vmem>>, vector<1x24xf32>
    %38 = vector.shape_cast %37 : vector<1x24xf32> to vector<1x1x24xf32>
    %c0_22 = arith.constant 0 : index
    %c0_23 = arith.constant 0 : index
    %39 = vector.load %arg6[%c0_22, %c0_23] : memref<4x24xf32, #tpu.memory_space<vmem>>, vector<4x24xf32>
    %c0_24 = arith.constant 0 : index
    %c0_25 = arith.constant 0 : index
    %40 = vector.load %arg7[%c0_24, %c0_25] : memref<4x1xf32, #tpu.memory_space<vmem>>, vector<4x1xf32>
    %cst_26 = arith.constant 0.000000e+00 : f32
    %41 = vector.broadcast %cst_26 : f32 to vector<8x16x24xf32>
    %c0_27 = arith.constant 0 : index
    %c0_28 = arith.constant 0 : index
    %c0_29 = arith.constant 0 : index
    %42 = vector.load %arg10[%c0_27, %c0_28, %c0_29] : memref<18x18x24xf32, #tpu.memory_space<vmem>>, vector<8x16x24xf32>
    %43 = vector.shape_cast %20 : vector<24xf32> to vector<1x1x24xf32>
    %44 = vector.broadcast %43 : vector<1x1x24xf32> to vector<8x16x24xf32>
    %45 = arith.mulf %42, %44 : vector<8x16x24xf32>
    %46 = arith.addf %41, %45 : vector<8x16x24xf32>
    %c0_30 = arith.constant 0 : index
    %c1_31 = arith.constant 1 : index
    %c0_32 = arith.constant 0 : index
    %47 = vector.load %arg10[%c0_30, %c1_31, %c0_32] : memref<18x18x24xf32, #tpu.memory_space<vmem>>, vector<8x16x24xf32>
    %48 = vector.shape_cast %22 : vector<24xf32> to vector<1x1x24xf32>
    %49 = vector.broadcast %48 : vector<1x1x24xf32> to vector<8x16x24xf32>
    %50 = arith.mulf %47, %49 : vector<8x16x24xf32>
    %51 = arith.addf %46, %50 : vector<8x16x24xf32>
    %c0_33 = arith.constant 0 : index
    %c2 = arith.constant 2 : index
    %c0_34 = arith.constant 0 : index
    %52 = vector.load %arg10[%c0_33, %c2, %c0_34] : memref<18x18x24xf32, #tpu.memory_space<vmem>>, vector<8x16x24xf32>
    %53 = vector.shape_cast %24 : vector<24xf32> to vector<1x1x24xf32>
    %54 = vector.broadcast %53 : vector<1x1x24xf32> to vector<8x16x24xf32>
    %55 = arith.mulf %52, %54 : vector<8x16x24xf32>
    %56 = arith.addf %51, %55 : vector<8x16x24xf32>
    %c1_35 = arith.constant 1 : index
    %c0_36 = arith.constant 0 : index
    %c0_37 = arith.constant 0 : index
    %57 = vector.load %arg10[%c1_35, %c0_36, %c0_37] : memref<18x18x24xf32, #tpu.memory_space<vmem>>, vector<8x16x24xf32>
    %58 = vector.shape_cast %26 : vector<24xf32> to vector<1x1x24xf32>
    %59 = vector.broadcast %58 : vector<1x1x24xf32> to vector<8x16x24xf32>
    %60 = arith.mulf %57, %59 : vector<8x16x24xf32>
    %61 = arith.addf %56, %60 : vector<8x16x24xf32>
    %c1_38 = arith.constant 1 : index
    %c1_39 = arith.constant 1 : index
    %c0_40 = arith.constant 0 : index
    %62 = vector.load %arg10[%c1_38, %c1_39, %c0_40] : memref<18x18x24xf32, #tpu.memory_space<vmem>>, vector<8x16x24xf32>
    %63 = vector.shape_cast %28 : vector<24xf32> to vector<1x1x24xf32>
    %64 = vector.broadcast %63 : vector<1x1x24xf32> to vector<8x16x24xf32>
    %65 = arith.mulf %62, %64 : vector<8x16x24xf32>
    %66 = arith.addf %61, %65 : vector<8x16x24xf32>
    %c1_41 = arith.constant 1 : index
    %c2_42 = arith.constant 2 : index
    %c0_43 = arith.constant 0 : index
    %67 = vector.load %arg10[%c1_41, %c2_42, %c0_43] : memref<18x18x24xf32, #tpu.memory_space<vmem>>, vector<8x16x24xf32>
    %68 = vector.shape_cast %30 : vector<24xf32> to vector<1x1x24xf32>
    %69 = vector.broadcast %68 : vector<1x1x24xf32> to vector<8x16x24xf32>
    %70 = arith.mulf %67, %69 : vector<8x16x24xf32>
    %71 = arith.addf %66, %70 : vector<8x16x24xf32>
    %c2_44 = arith.constant 2 : index
    %c0_45 = arith.constant 0 : index
    %c0_46 = arith.constant 0 : index
    %72 = vector.load %arg10[%c2_44, %c0_45, %c0_46] : memref<18x18x24xf32, #tpu.memory_space<vmem>>, vector<8x16x24xf32>
    %73 = vector.shape_cast %32 : vector<24xf32> to vector<1x1x24xf32>
    %74 = vector.broadcast %73 : vector<1x1x24xf32> to vector<8x16x24xf32>
    %75 = arith.mulf %72, %74 : vector<8x16x24xf32>
    %76 = arith.addf %71, %75 : vector<8x16x24xf32>
    %c2_47 = arith.constant 2 : index
    %c1_48 = arith.constant 1 : index
    %c0_49 = arith.constant 0 : index
    %77 = vector.load %arg10[%c2_47, %c1_48, %c0_49] : memref<18x18x24xf32, #tpu.memory_space<vmem>>, vector<8x16x24xf32>
    %78 = vector.shape_cast %34 : vector<24xf32> to vector<1x1x24xf32>
    %79 = vector.broadcast %78 : vector<1x1x24xf32> to vector<8x16x24xf32>
    %80 = arith.mulf %77, %79 : vector<8x16x24xf32>
    %81 = arith.addf %76, %80 : vector<8x16x24xf32>
    %c2_50 = arith.constant 2 : index
    %c2_51 = arith.constant 2 : index
    %c0_52 = arith.constant 0 : index
    %82 = vector.load %arg10[%c2_50, %c2_51, %c0_52] : memref<18x18x24xf32, #tpu.memory_space<vmem>>, vector<8x16x24xf32>
    %83 = vector.shape_cast %36 : vector<24xf32> to vector<1x1x24xf32>
    %84 = vector.broadcast %83 : vector<1x1x24xf32> to vector<8x16x24xf32>
    %85 = arith.mulf %82, %84 : vector<8x16x24xf32>
    %86 = arith.addf %81, %85 : vector<8x16x24xf32>
    %87 = vector.broadcast %38 : vector<1x1x24xf32> to vector<8x16x24xf32>
    %88 = arith.addf %86, %87 : vector<8x16x24xf32>
    %cst_53 = arith.constant 0.000000e+00 : f32
    %cst_54 = arith.constant 6.000000e+00 : f32
    %89 = vector.broadcast %cst_53 : f32 to vector<8x16x24xf32>
    %90 = arith.maximumf %89, %88 : vector<8x16x24xf32>
    %91 = vector.broadcast %cst_54 : f32 to vector<8x16x24xf32>
    %92 = arith.minimumf %91, %90 : vector<8x16x24xf32>
    %93 = vector.shape_cast %92 : vector<8x16x24xf32> to vector<128x24xf32>
    %cst_55 = arith.constant dense<0.000000e+00> : vector<4x128xf32>
    %94 = tpu.matmul %39, %93, %cst_55 {dimension_numbers = #tpu.dot_dimension_numbers<[1], [1], [0], [0], [0, 0, 1, 0], [], []>} : vector<4x24xf32>, vector<128x24xf32>, vector<4x128xf32> -> vector<4x128xf32>
    %95 = vector.broadcast %40 : vector<4x1xf32> to vector<4x128xf32>
    %96 = arith.addf %94, %95 : vector<4x128xf32>
    %c0_56 = arith.constant 0 : index
    %c0_57 = arith.constant 0 : index
    %c0_58 = arith.constant 0 : index
    %97 = vector.load %arg8[%c0_56, %c0_57, %c0_58] : memref<1x4x256xf32, #tpu.memory_space<vmem>>, vector<1x4x128xf32>
    %98 = vector.shape_cast %97 : vector<1x4x128xf32> to vector<4x128xf32>
    %99 = arith.addf %96, %98 : vector<4x128xf32>
    %c0_59 = arith.constant 0 : index
    %c0_60 = arith.constant 0 : index
    %c0_61 = arith.constant 0 : index
    %100 = vector.load %arg9[%c0_59, %c0_60, %c0_61] : memref<1x4x256xf32, #tpu.memory_space<vmem>>, vector<1x4x128xf32>
    %101 = vector.shape_cast %100 : vector<1x4x128xf32> to vector<4x128xf32>
    %102 = vector.shape_cast %99 : vector<4x128xf32> to vector<1x4x128xf32>
    tpu.vector_store %arg9[%c0_59, %c0_60, %c0_61], %102 {strides = array<i32>} : memref<1x4x256xf32, #tpu.memory_space<vmem>>, vector<1x4x128xf32>,
    %cst_62 = arith.constant 0.000000e+00 : f32
    %103 = vector.broadcast %cst_62 : f32 to vector<8x16x24xf32>
    %c8 = arith.constant 8 : index
    %c0_63 = arith.constant 0 : index
    %c0_64 = arith.constant 0 : index
    %104 = vector.load %arg10[%c8, %c0_63, %c0_64] : memref<18x18x24xf32, #tpu.memory_space<vmem>>, vector<8x16x24xf32>
    %105 = vector.shape_cast %20 : vector<24xf32> to vector<1x1x24xf32>
    %106 = vector.broadcast %105 : vector<1x1x24xf32> to vector<8x16x24xf32>
    %107 = arith.mulf %104, %106 : vector<8x16x24xf32>
    %108 = arith.addf %103, %107 : vector<8x16x24xf32>
    %c8_65 = arith.constant 8 : index
    %c1_66 = arith.constant 1 : index
    %c0_67 = arith.constant 0 : index
    %109 = vector.load %arg10[%c8_65, %c1_66, %c0_67] : memref<18x18x24xf32, #tpu.memory_space<vmem>>, vector<8x16x24xf32>
    %110 = vector.shape_cast %22 : vector<24xf32> to vector<1x1x24xf32>
    %111 = vector.broadcast %110 : vector<1x1x24xf32> to vector<8x16x24xf32>
    %112 = arith.mulf %109, %111 : vector<8x16x24xf32>
    %113 = arith.addf %108, %112 : vector<8x16x24xf32>
    %c8_68 = arith.constant 8 : index
    %c2_69 = arith.constant 2 : index
    %c0_70 = arith.constant 0 : index
    %114 = vector.load %arg10[%c8_68, %c2_69, %c0_70] : memref<18x18x24xf32, #tpu.memory_space<vmem>>, vector<8x16x24xf32>
    %115 = vector.shape_cast %24 : vector<24xf32> to vector<1x1x24xf32>
    %116 = vector.broadcast %115 : vector<1x1x24xf32> to vector<8x16x24xf32>
    %117 = arith.mulf %114, %116 : vector<8x16x24xf32>
    %118 = arith.addf %113, %117 : vector<8x16x24xf32>
    %c9 = arith.constant 9 : index
    %c0_71 = arith.constant 0 : index
    %c0_72 = arith.constant 0 : index
    %119 = vector.load %arg10[%c9, %c0_71, %c0_72] : memref<18x18x24xf32, #tpu.memory_space<vmem>>, vector<8x16x24xf32>
    %120 = vector.shape_cast %26 : vector<24xf32> to vector<1x1x24xf32>
    %121 = vector.broadcast %120 : vector<1x1x24xf32> to vector<8x16x24xf32>
    %122 = arith.mulf %119, %121 : vector<8x16x24xf32>
    %123 = arith.addf %118, %122 : vector<8x16x24xf32>
    %c9_73 = arith.constant 9 : index
    %c1_74 = arith.constant 1 : index
    %c0_75 = arith.constant 0 : index
    %124 = vector.load %arg10[%c9_73, %c1_74, %c0_75] : memref<18x18x24xf32, #tpu.memory_space<vmem>>, vector<8x16x24xf32>
    %125 = vector.shape_cast %28 : vector<24xf32> to vector<1x1x24xf32>
    %126 = vector.broadcast %125 : vector<1x1x24xf32> to vector<8x16x24xf32>
    %127 = arith.mulf %124, %126 : vector<8x16x24xf32>
    %128 = arith.addf %123, %127 : vector<8x16x24xf32>
    %c9_76 = arith.constant 9 : index
    %c2_77 = arith.constant 2 : index
    %c0_78 = arith.constant 0 : index
    %129 = vector.load %arg10[%c9_76, %c2_77, %c0_78] : memref<18x18x24xf32, #tpu.memory_space<vmem>>, vector<8x16x24xf32>
    %130 = vector.shape_cast %30 : vector<24xf32> to vector<1x1x24xf32>
    %131 = vector.broadcast %130 : vector<1x1x24xf32> to vector<8x16x24xf32>
    %132 = arith.mulf %129, %131 : vector<8x16x24xf32>
    %133 = arith.addf %128, %132 : vector<8x16x24xf32>
    %c10 = arith.constant 10 : index
    %c0_79 = arith.constant 0 : index
    %c0_80 = arith.constant 0 : index
    %134 = vector.load %arg10[%c10, %c0_79, %c0_80] : memref<18x18x24xf32, #tpu.memory_space<vmem>>, vector<8x16x24xf32>
    %135 = vector.shape_cast %32 : vector<24xf32> to vector<1x1x24xf32>
    %136 = vector.broadcast %135 : vector<1x1x24xf32> to vector<8x16x24xf32>
    %137 = arith.mulf %134, %136 : vector<8x16x24xf32>
    %138 = arith.addf %133, %137 : vector<8x16x24xf32>
    %c10_81 = arith.constant 10 : index
    %c1_82 = arith.constant 1 : index
    %c0_83 = arith.constant 0 : index
    %139 = vector.load %arg10[%c10_81, %c1_82, %c0_83] : memref<18x18x24xf32, #tpu.memory_space<vmem>>, vector<8x16x24xf32>
    %140 = vector.shape_cast %34 : vector<24xf32> to vector<1x1x24xf32>
    %141 = vector.broadcast %140 : vector<1x1x24xf32> to vector<8x16x24xf32>
    %142 = arith.mulf %139, %141 : vector<8x16x24xf32>
    %143 = arith.addf %138, %142 : vector<8x16x24xf32>
    %c10_84 = arith.constant 10 : index
    %c2_85 = arith.constant 2 : index
    %c0_86 = arith.constant 0 : index
    %144 = vector.load %arg10[%c10_84, %c2_85, %c0_86] : memref<18x18x24xf32, #tpu.memory_space<vmem>>, vector<8x16x24xf32>
    %145 = vector.shape_cast %36 : vector<24xf32> to vector<1x1x24xf32>
    %146 = vector.broadcast %145 : vector<1x1x24xf32> to vector<8x16x24xf32>
    %147 = arith.mulf %144, %146 : vector<8x16x24xf32>
    %148 = arith.addf %143, %147 : vector<8x16x24xf32>
    %149 = vector.broadcast %38 : vector<1x1x24xf32> to vector<8x16x24xf32>
    %150 = arith.addf %148, %149 : vector<8x16x24xf32>
    %cst_87 = arith.constant 0.000000e+00 : f32
    %cst_88 = arith.constant 6.000000e+00 : f32
    %151 = vector.broadcast %cst_87 : f32 to vector<8x16x24xf32>
    %152 = arith.maximumf %151, %150 : vector<8x16x24xf32>
    %153 = vector.broadcast %cst_88 : f32 to vector<8x16x24xf32>
    %154 = arith.minimumf %153, %152 : vector<8x16x24xf32>
    %155 = vector.shape_cast %154 : vector<8x16x24xf32> to vector<128x24xf32>
    %cst_89 = arith.constant dense<0.000000e+00> : vector<4x128xf32>
    %156 = tpu.matmul %39, %155, %cst_89 {dimension_numbers = #tpu.dot_dimension_numbers<[1], [1], [0], [0], [0, 0, 1, 0], [], []>} : vector<4x24xf32>, vector<128x24xf32>, vector<4x128xf32> -> vector<4x128xf32>
    %157 = vector.broadcast %40 : vector<4x1xf32> to vector<4x128xf32>
    %158 = arith.addf %156, %157 : vector<4x128xf32>
    %c0_90 = arith.constant 0 : index
    %c0_91 = arith.constant 0 : index
    %c128 = arith.constant 128 : index
    %159 = vector.load %arg8[%c0_90, %c0_91, %c128] : memref<1x4x256xf32, #tpu.memory_space<vmem>>, vector<1x4x128xf32>
    %160 = vector.shape_cast %159 : vector<1x4x128xf32> to vector<4x128xf32>
    %161 = arith.addf %158, %160 : vector<4x128xf32>
    %c0_92 = arith.constant 0 : index
    %c0_93 = arith.constant 0 : index
    %c128_94 = arith.constant 128 : index
    %162 = vector.load %arg9[%c0_92, %c0_93, %c128_94] : memref<1x4x256xf32, #tpu.memory_space<vmem>>, vector<1x4x128xf32>
    %163 = vector.shape_cast %162 : vector<1x4x128xf32> to vector<4x128xf32>
    %164 = vector.shape_cast %161 : vector<4x128xf32> to vector<1x4x128xf32>
    tpu.vector_store %arg9[%c0_92, %c0_93, %c128_94], %164 {strides = array<i32>} : memref<1x4x256xf32, #tpu.memory_space<vmem>>, vector<1x4x128xf32>,
    return
  }
  func.func @transform_0(%arg0: i32) -> (i32, i32, i32) {
    %c0_i32 = arith.constant 0 : i32
    %c0_i32_0 = arith.constant 0 : i32
    %c0_i32_1 = arith.constant 0 : i32
    return %arg0, %c0_i32, %c0_i32_0 : i32, i32, i32
  }
  func.func @transform_1(%arg0: i32) -> (i32, i32) {
    %c0_i32 = arith.constant 0 : i32
    %c0_i32_0 = arith.constant 0 : i32
    %c0_i32_1 = arith.constant 0 : i32
    return %c0_i32, %c0_i32_0 : i32, i32
  }
  func.func @transform_2(%arg0: i32) -> (i32, i32) {
    %c0_i32 = arith.constant 0 : i32
    %c0_i32_0 = arith.constant 0 : i32
    %c0_i32_1 = arith.constant 0 : i32
    return %c0_i32, %c0_i32_0 : i32, i32
  }
  func.func @transform_3(%arg0: i32) -> (i32, i32, i32) {
    %c0_i32 = arith.constant 0 : i32
    %c0_i32_0 = arith.constant 0 : i32
    %c0_i32_1 = arith.constant 0 : i32
    %c0_i32_2 = arith.constant 0 : i32
    return %c0_i32, %c0_i32_0, %c0_i32_1 : i32, i32, i32
  }
  func.func @transform_4(%arg0: i32) -> (i32, i32) {
    %c0_i32 = arith.constant 0 : i32
    %c0_i32_0 = arith.constant 0 : i32
    %c0_i32_1 = arith.constant 0 : i32
    return %c0_i32, %c0_i32_0 : i32, i32
  }
  func.func @transform_5(%arg0: i32) -> (i32, i32) {
    %c0_i32 = arith.constant 0 : i32
    %c0_i32_0 = arith.constant 0 : i32
    %c0_i32_1 = arith.constant 0 : i32
    return %c0_i32, %c0_i32_0 : i32, i32
  }
  func.func @transform_6(%arg0: i32) -> (i32, i32) {
    %c0_i32 = arith.constant 0 : i32
    %c0_i32_0 = arith.constant 0 : i32
    %c0_i32_1 = arith.constant 0 : i32
    return %c0_i32, %c0_i32_0 : i32, i32
  }
  func.func @transform_7(%arg0: i32) -> (i32, i32, i32) {
    %c0_i32 = arith.constant 0 : i32
    %c0_i32_0 = arith.constant 0 : i32
    %c0_i32_1 = arith.constant 0 : i32
    return %arg0, %c0_i32, %c0_i32_0 : i32, i32, i32
  }
  func.func @transform_8(%arg0: i32) -> (i32, i32, i32) {
    %c0_i32 = arith.constant 0 : i32
    %c0_i32_0 = arith.constant 0 : i32
    %c0_i32_1 = arith.constant 0 : i32
    return %arg0, %c0_i32, %c0_i32_0 : i32, i32, i32
  }
}

</mosaic_0001>

<llo_original>
// kernel: base_block_forward.1
$region0: #{base_block_forward.1}
  #allocation0 [shape = 'u32[]', space=smem, size = 0x4, offset = 0x4, fixed_abs, tag = 'smem constant byte address 0x4 - core index']
  #allocation1 [shape = 'u32[144,128]{1,0:T(1,128)}', space=vmem, size = 0x12000, scoped, tag = 'internal scratch']
  #allocation2 [shape = 'f32[18,18,24]{2,1,0:T(8,128)}', space=vmem, size = 0x36000, scoped, tag = 'scratch operand']
  %s0 = inlined_call_operand.vmem [shape: f32[2,256,4], index: 0, kind: input, shape index: {}]
  %s1 = inlined_call_operand.vmem [shape: f32[4,24], index: 1, kind: input, shape index: {}]
  %s2 = inlined_call_operand.vmem [shape: f32[1,24], index: 2, kind: input, shape index: {}]
  %s3 = inlined_call_operand.vmem [shape: f32[3,3,24], index: 3, kind: input, shape index: {}]
  %s4 = inlined_call_operand.vmem [shape: f32[1,24], index: 4, kind: input, shape index: {}]
  %s5 = inlined_call_operand.vmem [shape: f32[4,24], index: 5, kind: input, shape index: {}]
  %s6 = inlined_call_operand.vmem [shape: f32[4,1], index: 6, kind: input, shape index: {}]
  %s7 = inlined_call_operand.vmem [shape: f32[2,4,256], index: 7, kind: input, shape index: {}]
  %s8 = inlined_call_operand.vmem [shape: f32[2,4,256], index: 8, kind: output, shape index: {}]
  %s9 = sld [smem:[#allocation0]]
  $region65: #{base_block_forward.1} parent=0
    _
  %s11 = ssub.s32 1, %s9
  %s12 = scalar_select 0, %s11, %s9
  loop: start=0, step=1, limit=4
  $region2: #{base_block_forward.1} parent=0 // loop_pre_header
    _
  $region3: #{base_block_forward.1} parent=0 // loop_header
    %s14 = sphi 0, %s18
    %p15 = scmp.ge.s32.totalorder %s14, 4
    %s24 = sphi 0, %s26
    %s27 = sphi 0, %s24
    %s28 = sphi 0, %s27
    %s44 = sphi 0, %s28
    %s48 = sphi 0, %s48
    %s50 = sphi 0, %s48
    %s51 = sphi 0, %s50
    %s65 = sphi 0, %s51
    %s69 = sphi 0, %s69
    %s71 = sphi 0, %s69
    %s72 = sphi 0, %s71
    %s86 = sphi 0, %s72
    %s90 = sphi 0, %s90
    %s92 = sphi 0, %s90
    %s93 = sphi 0, %s92
    %s107 = sphi 0, %s93
    %s111 = sphi 0, %s111
    %s113 = sphi 0, %s111
    %s114 = sphi 0, %s113
    %s128 = sphi 0, %s114
    %s132 = sphi 0, %s132
    %s134 = sphi 0, %s132
    %s135 = sphi 0, %s134
    %s149 = sphi 0, %s135
    %s153 = sphi 0, %s153
    %s155 = sphi 0, %s153
    %s156 = sphi 0, %s155
    %s170 = sphi 0, %s156
    %s176 = sphi 0, %s178
    %s179 = sphi 0, %s176
    %s180 = sphi 0, %s179
    %s196 = sphi 0, %s180
    %s202 = sphi 0, %s204
    %s205 = sphi 0, %s202
    %s206 = sphi 0, %s205
    %s222 = sphi 0, %s206
  $region4: #{base_block_forward.1} parent=0 // loop_header_branch
    %17 = sbr.rel (%p15) target = $region8
  $region5: #{base_block_forward.1} parent=0 // loop_body
    %s19 = ssub.s32 %s14, 1
    %s20 = ssub.s32 %s14, 2
    %s21 = sadd.s32 %s14, 1
    %s22 = ssub.s32 %s14, %s21
    %p23 = scmp.eq.s32.totalorder %s22, 0
    %s25 = sadd.s32 %s24, 1
    %s26 = scalar_select %p23, %s24, %s25
    %p29 = pneg %p23
    %p30 = scmp.eq.s32.totalorder %s14, 1
    %p31 = por %p29, %p30
    %p32 = scmp.ne.s32.totalorder %s24, %s27
    %p33 = scmp.eq.s32.totalorder %s14, 0
    %p34 = por %p32, %p33
    %p35 = scmp.ne.s32.totalorder %s24, %s27
    %p36 = scmp.eq.s32.totalorder %s19, 1
    %p37 = por %p35, %p36
    %p38 = scmp.ne.s32.totalorder %s27, %s28
    %p39 = scmp.eq.s32.totalorder %s19, 0
    %p40 = por %p38, %p39
    %p41 = scmp.ne.s32.totalorder %s27, %s28
    %p42 = scmp.eq.s32.totalorder %s20, 1
    %p43 = por %p41, %p42
    %p45 = scmp.ne.s32.totalorder %s28, %s44
    %p46 = scmp.eq.s32.totalorder %s20, 0
    %p47 = por %p45, %p46
    %s49 = sadd.s32 %s48, 1
    %p52 = scmp.eq.s32.totalorder %s14, 1
    %p53 = scmp.ne.s32.totalorder %s48, %s50
    %p54 = scmp.eq.s32.totalorder %s14, 0
    %p55 = por %p53, %p54
    %p56 = scmp.ne.s32.totalorder %s48, %s50
    %p57 = scmp.eq.s32.totalorder %s19, 1
    %p58 = por %p56, %p57
    %p59 = scmp.ne.s32.totalorder %s50, %s51
    %p60 = scmp.eq.s32.totalorder %s19, 0
    %p61 = por %p59, %p60
    %p62 = scmp.ne.s32.totalorder %s50, %s51
    %p63 = scmp.eq.s32.totalorder %s20, 1
    %p64 = por %p62, %p63
    %p66 = scmp.ne.s32.totalorder %s51, %s65
    %p67 = scmp.eq.s32.totalorder %s20, 0
    %p68 = por %p66, %p67
    %s70 = sadd.s32 %s69, 1
    %p73 = scmp.eq.s32.totalorder %s14, 1
    %p74 = scmp.ne.s32.totalorder %s69, %s71
    %p75 = scmp.eq.s32.totalorder %s14, 0
    %p76 = por %p74, %p75
    %p77 = scmp.ne.s32.totalorder %s69, %s71
    %p78 = scmp.eq.s32.totalorder %s19, 1
    %p79 = por %p77, %p78
    %p80 = scmp.ne.s32.totalorder %s71, %s72
    %p81 = scmp.eq.s32.totalorder %s19, 0
    %p82 = por %p80, %p81
    %p83 = scmp.ne.s32.totalorder %s71, %s72
    %p84 = scmp.eq.s32.totalorder %s20, 1
    %p85 = por %p83, %p84
    %p87 = scmp.ne.s32.totalorder %s72, %s86
    %p88 = scmp.eq.s32.totalorder %s20, 0
    %p89 = por %p87, %p88
    %s91 = sadd.s32 %s90, 1
    %p94 = scmp.eq.s32.totalorder %s14, 1
    %p95 = scmp.ne.s32.totalorder %s90, %s92
    %p96 = scmp.eq.s32.totalorder %s14, 0
    %p97 = por %p95, %p96
    %p98 = scmp.ne.s32.totalorder %s90, %s92
    %p99 = scmp.eq.s32.totalorder %s19, 1
    %p100 = por %p98, %p99
    %p101 = scmp.ne.s32.totalorder %s92, %s93
    %p102 = scmp.eq.s32.totalorder %s19, 0
    %p103 = por %p101, %p102
    %p104 = scmp.ne.s32.totalorder %s92, %s93
    %p105 = scmp.eq.s32.totalorder %s20, 1
    %p106 = por %p104, %p105
    %p108 = scmp.ne.s32.totalorder %s93, %s107
    %p109 = scmp.eq.s32.totalorder %s20, 0
    %p110 = por %p108, %p109
    %s112 = sadd.s32 %s111, 1
    %p115 = scmp.eq.s32.totalorder %s14, 1
    %p116 = scmp.ne.s32.totalorder %s111, %s113
    %p117 = scmp.eq.s32.totalorder %s14, 0
    %p118 = por %p116, %p117
    %p119 = scmp.ne.s32.totalorder %s111, %s113
    %p120 = scmp.eq.s32.totalorder %s19, 1
    %p121 = por %p119, %p120
    %p122 = scmp.ne.s32.totalorder %s113, %s114
    %p123 = scmp.eq.s32.totalorder %s19, 0
    %p124 = por %p122, %p123
    %p125 = scmp.ne.s32.totalorder %s113, %s114
    %p126 = scmp.eq.s32.totalorder %s20, 1
    %p127 = por %p125, %p126
    %p129 = scmp.ne.s32.totalorder %s114, %s128
    %p130 = scmp.eq.s32.totalorder %s20, 0
    %p131 = por %p129, %p130
    %s133 = sadd.s32 %s132, 1
    %p136 = scmp.eq.s32.totalorder %s14, 1
    %p137 = scmp.ne.s32.totalorder %s132, %s134
    %p138 = scmp.eq.s32.totalorder %s14, 0
    %p139 = por %p137, %p138
    %p140 = scmp.ne.s32.totalorder %s132, %s134
    %p141 = scmp.eq.s32.totalorder %s19, 1
    %p142 = por %p140, %p141
    %p143 = scmp.ne.s32.totalorder %s134, %s135
    %p144 = scmp.eq.s32.totalorder %s19, 0
    %p145 = por %p143, %p144
    %p146 = scmp.ne.s32.totalorder %s134, %s135
    %p147 = scmp.eq.s32.totalorder %s20, 1
    %p148 = por %p146, %p147
    %p150 = scmp.ne.s32.totalorder %s135, %s149
    %p151 = scmp.eq.s32.totalorder %s20, 0
    %p152 = por %p150, %p151
    %s154 = sadd.s32 %s153, 1
    %p157 = scmp.eq.s32.totalorder %s14, 1
    %p158 = scmp.ne.s32.totalorder %s153, %s155
    %p159 = scmp.eq.s32.totalorder %s14, 0
    %p160 = por %p158, %p159
    %p161 = scmp.ne.s32.totalorder %s153, %s155
    %p162 = scmp.eq.s32.totalorder %s19, 1
    %p163 = por %p161, %p162
    %p164 = scmp.ne.s32.totalorder %s155, %s156
    %p165 = scmp.eq.s32.totalorder %s19, 0
    %p166 = por %p164, %p165
    %p167 = scmp.ne.s32.totalorder %s155, %s156
    %p168 = scmp.eq.s32.totalorder %s20, 1
    %p169 = por %p167, %p168
    %p171 = scmp.ne.s32.totalorder %s156, %s170
    %p172 = scmp.eq.s32.totalorder %s20, 0
    %p173 = por %p171, %p172
    %s174 = ssub.s32 %s14, %s21
    %p175 = scmp.eq.s32.totalorder %s174, 0
    %s177 = sadd.s32 %s176, 1
    %s178 = scalar_select %p175, %s176, %s177
    %p181 = pneg %p175
    %p182 = scmp.eq.s32.totalorder %s14, 1
    %p183 = por %p181, %p182
    %p184 = scmp.ne.s32.totalorder %s176, %s179
    %p185 = scmp.eq.s32.totalorder %s14, 0
    %p186 = por %p184, %p185
    %p187 = scmp.ne.s32.totalorder %s176, %s179
    %p188 = scmp.eq.s32.totalorder %s19, 1
    %p189 = por %p187, %p188
    %p190 = scmp.ne.s32.totalorder %s179, %s180
    %p191 = scmp.eq.s32.totalorder %s19, 0
    %p192 = por %p190, %p191
    %p193 = scmp.ne.s32.totalorder %s179, %s180
    %p194 = scmp.eq.s32.totalorder %s20, 1
    %p195 = por %p193, %p194
    %p197 = scmp.ne.s32.totalorder %s180, %s196
    %p198 = scmp.eq.s32.totalorder %s20, 0
    %p199 = por %p197, %p198
    %s200 = ssub.s32 %s14, %s21
    %p201 = scmp.eq.s32.totalorder %s200, 0
    %s203 = sadd.s32 %s202, 1
    %s204 = scalar_select %p201, %s202, %s203
    %p207 = pneg %p201
    %p208 = scmp.eq.s32.totalorder %s14, 1
    %p209 = por %p207, %p208
    %p210 = scmp.ne.s32.totalorder %s202, %s205
    %p211 = scmp.eq.s32.totalorder %s14, 0
    %p212 = por %p210, %p211
    %p213 = scmp.ne.s32.totalorder %s202, %s205
    %p214 = scmp.eq.s32.totalorder %s19, 1
    %p215 = por %p213, %p214
    %p216 = scmp.ne.s32.totalorder %s205, %s206
    %p217 = scmp.eq.s32.totalorder %s19, 0
    %p218 = por %p216, %p217
    %p219 = scmp.ne.s32.totalorder %s205, %s206
    %p220 = scmp.eq.s32.totalorder %s20, 1
    %p221 = por %p219, %p220
    %p223 = scmp.ne.s32.totalorder %s206, %s222
    %p224 = scmp.eq.s32.totalorder %s20, 0
    %p225 = por %p223, %p224
    %p226 = scmp.le.s32.totalorder 1, %s14
    %p227 = scmp.lt.s32.totalorder %s14, 3
    %p228 = pnand %p226, %p227
    %p229 = pneg %p228
    // Predicated region
    $region9: #{base_block_forward.1} parent=5 // pred_check
      _
    $region10: #{base_block_forward.1} parent=5 // pred_check_branch
      %231 = sbr.rel (%p228) target = $region12
    $region11: #{base_block_forward.1} parent=5 // pred_region
      %s232 = ssub.s32 %s14, 1
      // Predicated region
      $region13: #{base_block_forward.1} parent=11 // pred_check
        %p233 = pneg %p61
      $region14: #{base_block_forward.1} parent=11 // pred_check_branch
        %235 = sbr.rel (%p233) target = $region16
      $region15: #{base_block_forward.1} parent=11 // pred_region
        _
      $region16: #{base_block_forward.1} parent=11 // pred_fallthru
        _
      // Predicated region
      $region17: #{base_block_forward.1} parent=11 // pred_check
        %p236 = pneg %p82
      $region18: #{base_block_forward.1} parent=11 // pred_check_branch
        %238 = sbr.rel (%p236) target = $region20
      $region19: #{base_block_forward.1} parent=11 // pred_region
        _
      $region20: #{base_block_forward.1} parent=11 // pred_fallthru
        _
      // Predicated region
      $region21: #{base_block_forward.1} parent=11 // pred_check
        %p239 = pneg %p103
      $region22: #{base_block_forward.1} parent=11 // pred_check_branch
        %241 = sbr.rel (%p239) target = $region24
      $region23: #{base_block_forward.1} parent=11 // pred_region
        _
      $region24: #{base_block_forward.1} parent=11 // pred_fallthru
        _
      // Predicated region
      $region25: #{base_block_forward.1} parent=11 // pred_check
        %p242 = pneg %p124
      $region26: #{base_block_forward.1} parent=11 // pred_check_branch
        %244 = sbr.rel (%p242) target = $region28
      $region27: #{base_block_forward.1} parent=11 // pred_region
        _
      $region28: #{base_block_forward.1} parent=11 // pred_fallthru
        _
      // Predicated region
      $region29: #{base_block_forward.1} parent=11 // pred_check
        %p245 = pneg %p145
      $region30: #{base_block_forward.1} parent=11 // pred_check_branch
        %247 = sbr.rel (%p245) target = $region32
      $region31: #{base_block_forward.1} parent=11 // pred_region
        _
      $region32: #{base_block_forward.1} parent=11 // pred_fallthru
        _
      // Predicated region
      $region33: #{base_block_forward.1} parent=11 // pred_check
        %p248 = pneg %p166
      $region34: #{base_block_forward.1} parent=11 // pred_check_branch
        %250 = sbr.rel (%p248) target = $region36
      $region35: #{base_block_forward.1} parent=11 // pred_region
        _
      $region36: #{base_block_forward.1} parent=11 // pred_fallthru
        _
    $region12: #{base_block_forward.1} parent=5 // pred_fallthru
      _
    %p251 = scmp.lt.s32.totalorder %s14, 2
    // Predicated region
    $region37: #{base_block_forward.1} parent=5 // pred_check
      %p252 = pneg %p251
    $region38: #{base_block_forward.1} parent=5 // pred_check_branch
      %254 = sbr.rel (%p252) target = $region40
    $region39: #{base_block_forward.1} parent=5 // pred_region
      // Predicated region
      $region41: #{base_block_forward.1} parent=39 // pred_check
        %p255 = pneg %p34
      $region42: #{base_block_forward.1} parent=39 // pred_check_branch
        %257 = sbr.rel (%p255) target = $region44
      $region43: #{base_block_forward.1} parent=39 // pred_region
        %p258 = scmp.lt.s32.totalorder %s14, 1
        %s259 = scalar_select %p258, %s14, 1
        %s260 = smul.addr %s259, 32
        %s261 = smul.addr %s260, 8
        %s262 = scalar_lea.vmem %s0, %s261
      $region44: #{base_block_forward.1} parent=39 // pred_fallthru
        _
      // Predicated region
      $region45: #{base_block_forward.1} parent=39 // pred_check
        %p263 = pneg %p186
      $region46: #{base_block_forward.1} parent=39 // pred_check_branch
        %265 = sbr.rel (%p263) target = $region48
      $region47: #{base_block_forward.1} parent=39 // pred_region
        %p266 = scmp.lt.s32.totalorder %s14, 1
        %s267 = scalar_select %p266, %s14, 1
        %s268 = smul.addr %s267, 2
        %s269 = smul.addr %s268, 4
        %s270 = scalar_lea.vmem %s7, %s269
      $region48: #{base_block_forward.1} parent=39 // pred_fallthru
        _
    $region40: #{base_block_forward.1} parent=5 // pred_fallthru
      _
    %p271 = scmp.le.s32.totalorder 1, %s14
    %p272 = scmp.lt.s32.totalorder %s14, 3
    %p273 = pnand %p271, %p272
    %p274 = pneg %p273
    // Predicated region
    $region49: #{base_block_forward.1} parent=5 // pred_check
      _
    $region50: #{base_block_forward.1} parent=5 // pred_check_branch
      %276 = sbr.rel (%p273) target = $region52
    $region51: #{base_block_forward.1} parent=5 // pred_region
      %s277 = ssub.s32 %s14, 1
      %p278 = scmp.lt.s32.totalorder %s19, 1
      %s279 = scalar_select %p278, %s19, 1
      %s280 = smul.addr %s279, 32
      %s281 = smul.addr %s280, 8
      %s282 = scalar_lea.vmem %s0, %s281
      %p283 = pneg %p40
      %p284 = pneg %p37
      %p285 = pneg %p61
      %p286 = pneg %p58
      %p287 = pneg %p82
      %p288 = pneg %p79
      %p289 = pneg %p103
      %p290 = pneg %p100
      %p291 = pneg %p124
      %p292 = pneg %p121
      %p293 = pneg %p145
      %p294 = pneg %p142
      %p295 = pneg %p166
      %p296 = pneg %p163
      %p297 = scmp.lt.s32.totalorder %s19, 1
      %s298 = scalar_select %p297, %s19, 1
      %s299 = smul.addr %s298, 2
      %s300 = smul.addr %s299, 4
      %s301 = scalar_lea.vmem %s7, %s300
      %p302 = pneg %p192
      %p303 = pneg %p189
      %p304 = pneg %p218
      %p305 = pneg %p215
      %p306 = scmp.lt.s32.totalorder %s19, 1
      %s307 = scalar_select %p306, %s19, 1
      %s308 = smul.addr %s307, 2
      %s309 = smul.addr %s308, 4
      %s310 = scalar_lea.vmem %s8, %s309
      %p311 = scmp.lt.s32.totalorder %s19, 1
      %s312 = scalar_select %p311, %s19, 1
      %s313 = smul.addr %s312, 32
      %s314 = smul.addr %s313, 8
      %s315 = scalar_lea.vmem %s0, %s314
      %p316 = scmp.lt.s32.totalorder %s19, 1
      %s317 = scalar_select %p316, %s19, 1
      %s318 = smul.addr %s317, 2
      %s319 = smul.addr %s318, 4
      %s320 = scalar_lea.vmem %s7, %s319
      %p321 = scmp.lt.s32.totalorder %s19, 1
      %s322 = scalar_select %p321, %s19, 1
      %s323 = smul.addr %s322, 2
      %s324 = smul.addr %s323, 4
      %s325 = scalar_lea.vmem %s8, %s324
      %v326 = vld [vmem:[%s315] sm:$0xff]
      %v327 = vld [vmem:[%s315 + $0x8] sm:$0xff]
      %v328 = vld [vmem:[%s315 + $0x10] sm:$0xff]
      %v329 = vld [vmem:[%s315 + $0x18] sm:$0xff]
      %v330 = vld [vmem:[%s315 + $0x20] sm:$0xff]
      %v331 = vld [vmem:[%s315 + $0x28] sm:$0xff]
      %v332 = vld [vmem:[%s315 + $0x30] sm:$0xff]
      %v333 = vld [vmem:[%s315 + $0x38] sm:$0xff]
      %v334 = vld [vmem:[%s315 + $0x40] sm:$0xff]
      %v335 = vld [vmem:[%s315 + $0x48] sm:$0xff]
      %v336 = vld [vmem:[%s315 + $0x50] sm:$0xff]
      %v337 = vld [vmem:[%s315 + $0x58] sm:$0xff]
      %v338 = vld [vmem:[%s315 + $0x60] sm:$0xff]
      %v339 = vld [vmem:[%s315 + $0x68] sm:$0xff]
      %v340 = vld [vmem:[%s315 + $0x70] sm:$0xff]
      %v341 = vld [vmem:[%s315 + $0x78] sm:$0xff]
      %v342 = vld [vmem:[%s315 + $0x80] sm:$0xff]
      %v343 = vld [vmem:[%s315 + $0x88] sm:$0xff]
      %v344 = vld [vmem:[%s315 + $0x90] sm:$0xff]
      %v345 = vld [vmem:[%s315 + $0x98] sm:$0xff]
      %v346 = vld [vmem:[%s315 + $0xa0] sm:$0xff]
      %v347 = vld [vmem:[%s315 + $0xa8] sm:$0xff]
      %v348 = vld [vmem:[%s315 + $0xb0] sm:$0xff]
      %v349 = vld [vmem:[%s315 + $0xb8] sm:$0xff]
      %v350 = vld [vmem:[%s315 + $0xc0] sm:$0xff]
      %v351 = vld [vmem:[%s315 + $0xc8] sm:$0xff]
      %v352 = vld [vmem:[%s315 + $0xd0] sm:$0xff]
      %v353 = vld [vmem:[%s315 + $0xd8] sm:$0xff]
      %v354 = vld [vmem:[%s315 + $0xe0] sm:$0xff]
      %v355 = vld [vmem:[%s315 + $0xe8] sm:$0xff]
      %v356 = vld [vmem:[%s315 + $0xf0] sm:$0xff]
      %v357 = vld [vmem:[%s315 + $0xf8] sm:$0xff]
      %v358 = vld [vmem:[%s1] sm:$0xf]
      %v359 = vld [vmem:[%s2] sm:$0x1]
      %v361 = vlaneseq
      %v362 = vshrl.u32 %v361, 7
      %v363 = vsub.s32 0, %v362
      %v364 = vrot.slane %v359, %v363
      %vm366 = vcmask 31744
      %v368 = vsel %vm366, %v326, 0
      %v371 = vsel %vm366, %v327, 0
      %v374 = vsel %vm366, %v328, 0
      %v377 = vsel %vm366, %v329, 0
      %v380 = vsel %vm366, %v330, 0
      %v383 = vsel %vm366, %v331, 0
      %v386 = vsel %vm366, %v332, 0
      %v389 = vsel %vm366, %v333, 0
      %v392 = vsel %vm366, %v334, 0
      %v395 = vsel %vm366, %v335, 0
      %v398 = vsel %vm366, %v336, 0
      %v401 = vsel %vm366, %v337, 0
      %v404 = vsel %vm366, %v338, 0
      %v407 = vsel %vm366, %v339, 0
      %v410 = vsel %vm366, %v340, 0
      %v413 = vsel %vm366, %v341, 0
      %v416 = vsel %vm366, %v342, 0
      %v419 = vsel %vm366, %v343, 0
      %v422 = vsel %vm366, %v344, 0
      %v425 = vsel %vm366, %v345, 0
      %v428 = vsel %vm366, %v346, 0
      %v431 = vsel %vm366, %v347, 0
      %v434 = vsel %vm366, %v348, 0
      %v437 = vsel %vm366, %v349, 0
      %v440 = vsel %vm366, %v350, 0
      %v443 = vsel %vm366, %v351, 0
      %v446 = vsel %vm366, %v352, 0
      %v449 = vsel %vm366, %v353, 0
      %v452 = vsel %vm366, %v354, 0
      %v455 = vsel %vm366, %v355, 0
      %v458 = vsel %vm366, %v356, 0
      %v461 = vsel %vm366, %v357, 0
      %vm463 = vcmask 1043456
      %v465 = vsel %vm463, %v358, 0
      %467 = vmatprep.subr.mxu0 0.0
      %468 = vmatpush1.msra.mxu0 %v465
      %469 = vmatprep.subr.mxu0 0.0
      %470 = vmatpush1.msra.mxu0 0.0
      %471 = vmatprep.subr.mxu0 0.0
      %472 = vmatpush1.msra.mxu0 0.0
      %473 = vmatprep.subr.mxu0 0.0
      %474 = vmatpush1.msra.mxu0 0.0
      %475 = vmatprep.subr.mxu0 0.0
      %476 = vmatpush1.msra.mxu0 0.0
      %477 = vmatprep.subr.mxu0 0.0
      %478 = vmatpush1.msra.mxu0 0.0
      %479 = vmatprep.subr.mxu0 0.0
      %480 = vmatpush1.msra.mxu0 0.0
      %481 = vmatprep.subr.mxu0 0.0
      %482 = vmatpush1.msra.mxu0 0.0
      %483 = vmatprep.subr.mxu0 0.0
      %484 = vmatpush1.msra.mxu0 0.0
      %485 = vmatprep.subr.mxu0 0.0
      %486 = vmatpush1.msra.mxu0 0.0
      %487 = vmatprep.subr.mxu0 0.0
      %488 = vmatpush1.msra.mxu0 0.0
      %489 = vmatprep.subr.mxu0 0.0
      %490 = vmatpush1.msra.mxu0 0.0
      %491 = vmatprep.subr.mxu0 0.0
      %492 = vmatpush1.msra.mxu0 0.0
      %493 = vmatprep.subr.mxu0 0.0
      %494 = vmatpush1.msra.mxu0 0.0
      %495 = vmatprep.subr.mxu0 0.0
      %496 = vmatpush1.msra.mxu0 0.0
      %497 = vmatprep.subr.mxu0 0.0
      %498 = vmatpush1.msra.mxu0 0.0
      %499 = vmatprep.subr.mxu0 0.0
      %500 = vmatpush1.msra.mxu0 0.0
      %501 = vmatprep.subr.mxu0 0.0
      %502 = vmatpush1.msra.mxu0 0.0
      %503 = vmatprep.subr.mxu0 0.0
      %504 = vmatpush1.msra.mxu0 0.0
      %505 = vmatprep.subr.mxu0 0.0
      %506 = vmatpush1.msra.mxu0 0.0
      %507 = vmatprep.subr.mxu0 0.0
      %508 = vmatpush1.msra.mxu0 0.0
      %509 = vmatprep.subr.mxu0 0.0
      %510 = vmatpush1.msra.mxu0 0.0
      %511 = vmatprep.subr.mxu0 0.0
      %512 = vmatpush1.msra.mxu0 0.0
      %513 = vmatprep.subr.mxu0 0.0
      %514 = vmatpush1.msra.mxu0 0.0
      %515 = vmatprep.subr.mxu0 0.0
      %516 = vmatpush1.msra.mxu0 0.0
      %517 = vmatprep.subr.mxu0 0.0
      %518 = vmatpush1.msra.mxu0 0.0
      %519 = vmatprep.subr.mxu0 0.0
      %520 = vmatpush1.msra.mxu0 0.0
      %521 = vmatprep.subr.mxu0 0.0
      %522 = vmatpush1.msra.mxu0 0.0
      %523 = vmatprep.subr.mxu0 0.0
      %524 = vmatpush1.msra.mxu0 0.0
      %525 = vmatprep.subr.mxu0 0.0
      %526 = vmatpush1.msra.mxu0 0.0
      %527 = vmatprep.subr.mxu0 0.0
      %528 = vmatpush1.msra.mxu0 0.0
      %529 = vmatprep.subr.mxu0 0.0
      %530 = vmatpush1.msra.mxu0 0.0
      %531 = vmatprep.mubr.f32.mxu0 0.0
      %532 = vmatmul.mubr.f32.gmra.mrb[0].mxu0 %v368
      %v533 = vpop.f32.mrb[0].mxu0
      %v534 = vadd.f32 %v364, %v533
      %v535 = vpop.f32.mrb[0].mxu0
      %536 = vmatprep.mubr.f32.mxu0 0.0
      %537 = vmatmul.mubr.f32.gmra.mrb[0].mxu0 %v371
      %v538 = vpop.f32.mrb[0].mxu0
      %v539 = vadd.f32 %v364, %v538
      %v540 = vpop.f32.mrb[0].mxu0
      %541 = vmatprep.mubr.f32.mxu0 0.0
      %542 = vmatmul.mubr.f32.gmra.mrb[0].mxu0 %v374
      %v543 = vpop.f32.mrb[0].mxu0
      %v544 = vadd.f32 %v364, %v543
      %v545 = vpop.f32.mrb[0].mxu0
      %546 = vmatprep.mubr.f32.mxu0 0.0
      %547 = vmatmul.mubr.f32.gmra.mrb[0].mxu0 %v377
      %v548 = vpop.f32.mrb[0].mxu0
      %v549 = vadd.f32 %v364, %v548
      %v550 = vpop.f32.mrb[0].mxu0
      %551 = vmatprep.mubr.f32.mxu0 0.0
      %552 = vmatmul.mubr.f32.gmra.mrb[0].mxu0 %v380
      %v553 = vpop.f32.mrb[0].mxu0
      %v554 = vadd.f32 %v364, %v553
      %v555 = vpop.f32.mrb[0].mxu0
      %556 = vmatprep.mubr.f32.mxu0 0.0
      %557 = vmatmul.mubr.f32.gmra.mrb[0].mxu0 %v383
      %v558 = vpop.f32.mrb[0].mxu0
      %v559 = vadd.f32 %v364, %v558
      %v560 = vpop.f32.mrb[0].mxu0
      %561 = vmatprep.mubr.f32.mxu0 0.0
      %562 = vmatmul.mubr.f32.gmra.mrb[0].mxu0 %v386
      %v563 = vpop.f32.mrb[0].mxu0
      %v564 = vadd.f32 %v364, %v563
      %v565 = vpop.f32.mrb[0].mxu0
      %566 = vmatprep.mubr.f32.mxu0 0.0
      %567 = vmatmul.mubr.f32.gmra.mrb[0].mxu0 %v389
      %v568 = vpop.f32.mrb[0].mxu0
      %v569 = vadd.f32 %v364, %v568
      %v570 = vpop.f32.mrb[0].mxu0
      %571 = vmatprep.mubr.f32.mxu0 0.0
      %572 = vmatmul.mubr.f32.gmra.mrb[0].mxu0 %v392
      %v573 = vpop.f32.mrb[0].mxu0
      %v574 = vadd.f32 %v364, %v573
      %v575 = vpop.f32.mrb[0].mxu0
      %576 = vmatprep.mubr.f32.mxu0 0.0
      %577 = vmatmul.mubr.f32.gmra.mrb[0].mxu0 %v395
      %v578 = vpop.f32.mrb[0].mxu0
      %v579 = vadd.f32 %v364, %v578
      %v580 = vpop.f32.mrb[0].mxu0
      %581 = vmatprep.mubr.f32.mxu0 0.0
      %582 = vmatmul.mubr.f32.gmra.mrb[0].mxu0 %v398
      %v583 = vpop.f32.mrb[0].mxu0
      %v584 = vadd.f32 %v364, %v583
      %v585 = vpop.f32.mrb[0].mxu0
      %586 = vmatprep.mubr.f32.mxu0 0.0
      %587 = vmatmul.mubr.f32.gmra.mrb[0].mxu0 %v401
      %v588 = vpop.f32.mrb[0].mxu0
      %v589 = vadd.f32 %v364, %v588
      %v590 = vpop.f32.mrb[0].mxu0
      %591 = vmatprep.mubr.f32.mxu0 0.0
      %592 = vmatmul.mubr.f32.gmra.mrb[0].mxu0 %v404
      %v593 = vpop.f32.mrb[0].mxu0
      %v594 = vadd.f32 %v364, %v593
      %v595 = vpop.f32.mrb[0].mxu0
      %596 = vmatprep.mubr.f32.mxu0 0.0
      %597 = vmatmul.mubr.f32.gmra.mrb[0].mxu0 %v407
      %v598 = vpop.f32.mrb[0].mxu0
      %v599 = vadd.f32 %v364, %v598
      %v600 = vpop.f32.mrb[0].mxu0
      %601 = vmatprep.mubr.f32.mxu0 0.0
      %602 = vmatmul.mubr.f32.gmra.mrb[0].mxu0 %v410
      %v603 = vpop.f32.mrb[0].mxu0
      %v604 = vadd.f32 %v364, %v603
      %v605 = vpop.f32.mrb[0].mxu0
      %606 = vmatprep.mubr.f32.mxu0 0.0
      %607 = vmatmul.mubr.f32.gmra.mrb[0].mxu0 %v413
      %v608 = vpop.f32.mrb[0].mxu0
      %v609 = vadd.f32 %v364, %v608
      %v610 = vpop.f32.mrb[0].mxu0
      %611 = vmatprep.mubr.f32.mxu0 0.0
      %612 = vmatmul.mubr.f32.gmra.mrb[0].mxu0 %v416
      %v613 = vpop.f32.mrb[0].mxu0
      %v614 = vadd.f32 %v364, %v613
      %v615 = vpop.f32.mrb[0].mxu0
      %616 = vmatprep.mubr.f32.mxu0 0.0
      %617 = vmatmul.mubr.f32.gmra.mrb[0].mxu0 %v419
      %v618 = vpop.f32.mrb[0].mxu0
      %v619 = vadd.f32 %v364, %v618
      %v620 = vpop.f32.mrb[0].mxu0
      %621 = vmatprep.mubr.f32.mxu0 0.0
      %622 = vmatmul.mubr.f32.gmra.mrb[0].mxu0 %v422
      %v623 = vpop.f32.mrb[0].mxu0
      %v624 = vadd.f32 %v364, %v623
      %v625 = vpop.f32.mrb[0].mxu0
      %626 = vmatprep.mubr.f32.mxu0 0.0
      %627 = vmatmul.mubr.f32.gmra.mrb[0].mxu0 %v425
      %v628 = vpop.f32.mrb[0].mxu0
      %v629 = vadd.f32 %v364, %v628
      %v630 = vpop.f32.mrb[0].mxu0
      %631 = vmatprep.mubr.f32.mxu0 0.0
      %632 = vmatmul.mubr.f32.gmra.mrb[0].mxu0 %v428
      %v633 = vpop.f32.mrb[0].mxu0
      %v634 = vadd.f32 %v364, %v633
      %v635 = vpop.f32.mrb[0].mxu0
      %636 = vmatprep.mubr.f32.mxu0 0.0
      %637 = vmatmul.mubr.f32.gmra.mrb[0].mxu0 %v431
      %v638 = vpop.f32.mrb[0].mxu0
      %v639 = vadd.f32 %v364, %v638
      %v640 = vpop.f32.mrb[0].mxu0
      %641 = vmatprep.mubr.f32.mxu0 0.0
      %642 = vmatmul.mubr.f32.gmra.mrb[0].mxu0 %v434
      %v643 = vpop.f32.mrb[0].mxu0
      %v644 = vadd.f32 %v364, %v643
      %v645 = vpop.f32.mrb[0].mxu0
      %646 = vmatprep.mubr.f32.mxu0 0.0
      %647 = vmatmul.mubr.f32.gmra.mrb[0].mxu0 %v437
      %v648 = vpop.f32.mrb[0].mxu0
      %v649 = vadd.f32 %v364, %v648
      %v650 = vpop.f32.mrb[0].mxu0
      %651 = vmatprep.mubr.f32.mxu0 0.0
      %652 = vmatmul.mubr.f32.gmra.mrb[0].mxu0 %v440
      %v653 = vpop.f32.mrb[0].mxu0
      %v654 = vadd.f32 %v364, %v653
      %v655 = vpop.f32.mrb[0].mxu0
      %656 = vmatprep.mubr.f32.mxu0 0.0
      %657 = vmatmul.mubr.f32.gmra.mrb[0].mxu0 %v443
      %v658 = vpop.f32.mrb[0].mxu0
      %v659 = vadd.f32 %v364, %v658
      %v660 = vpop.f32.mrb[0].mxu0
      %661 = vmatprep.mubr.f32.mxu0 0.0
      %662 = vmatmul.mubr.f32.gmra.mrb[0].mxu0 %v446
      %v663 = vpop.f32.mrb[0].mxu0
      %v664 = vadd.f32 %v364, %v663
      %v665 = vpop.f32.mrb[0].mxu0
      %666 = vmatprep.mubr.f32.mxu0 0.0
      %667 = vmatmul.mubr.f32.gmra.mrb[0].mxu0 %v449
      %v668 = vpop.f32.mrb[0].mxu0
      %v669 = vadd.f32 %v364, %v668
      %v670 = vpop.f32.mrb[0].mxu0
      %671 = vmatprep.mubr.f32.mxu0 0.0
      %672 = vmatmul.mubr.f32.gmra.mrb[0].mxu0 %v452
      %v673 = vpop.f32.mrb[0].mxu0
      %v674 = vadd.f32 %v364, %v673
      %v675 = vpop.f32.mrb[0].mxu0
      %676 = vmatprep.mubr.f32.mxu0 0.0
      %677 = vmatmul.mubr.f32.gmra.mrb[0].mxu0 %v455
      %v678 = vpop.f32.mrb[0].mxu0
      %v679 = vadd.f32 %v364, %v678
      %v680 = vpop.f32.mrb[0].mxu0
      %681 = vmatprep.mubr.f32.mxu0 0.0
      %682 = vmatmul.mubr.f32.gmra.mrb[0].mxu0 %v458
      %v683 = vpop.f32.mrb[0].mxu0
      %v684 = vadd.f32 %v364, %v683
      %v685 = vpop.f32.mrb[0].mxu0
      %686 = vmatprep.mubr.f32.mxu0 0.0
      %687 = vmatmul.mubr.f32.gmra.mrb[0].mxu0 %v461
      %v688 = vpop.f32.mrb[0].mxu0
      %v689 = vadd.f32 %v364, %v688
      %v690 = vpop.f32.mrb[0].mxu0
      %691 = vdwg.mxu0
      %v692 = vmax.f32 %v534, 0.0
      %v693 = vmax.f32 %v539, 0.0
      %v694 = vmax.f32 %v544, 0.0
      %v695 = vmax.f32 %v549, 0.0
      %v696 = vmax.f32 %v554, 0.0
      %v697 = vmax.f32 %v559, 0.0
      %v698 = vmax.f32 %v564, 0.0
      %v699 = vmax.f32 %v569, 0.0
      %v700 = vmax.f32 %v574, 0.0
      %v701 = vmax.f32 %v579, 0.0
      %v702 = vmax.f32 %v584, 0.0
      %v703 = vmax.f32 %v589, 0.0
      %v704 = vmax.f32 %v594, 0.0
      %v705 = vmax.f32 %v599, 0.0
      %v706 = vmax.f32 %v604, 0.0
      %v707 = vmax.f32 %v609, 0.0
      %v708 = vmax.f32 %v614, 0.0
      %v709 = vmax.f32 %v619, 0.0
      %v710 = vmax.f32 %v624, 0.0
      %v711 = vmax.f32 %v629, 0.0
      %v712 = vmax.f32 %v634, 0.0
      %v713 = vmax.f32 %v639, 0.0
      %v714 = vmax.f32 %v644, 0.0
      %v715 = vmax.f32 %v649, 0.0
      %v716 = vmax.f32 %v654, 0.0
      %v717 = vmax.f32 %v659, 0.0
      %v718 = vmax.f32 %v664, 0.0
      %v719 = vmax.f32 %v669, 0.0
      %v720 = vmax.f32 %v674, 0.0
      %v721 = vmax.f32 %v679, 0.0
      %v722 = vmax.f32 %v684, 0.0
      %v723 = vmax.f32 %v689, 0.0
      %v724 = vmin.f32 %v692, 6.0
      %v725 = vmin.f32 %v693, 6.0
      %v726 = vmin.f32 %v694, 6.0
      %v727 = vmin.f32 %v695, 6.0
      %v728 = vmin.f32 %v696, 6.0
      %v729 = vmin.f32 %v697, 6.0
      %v730 = vmin.f32 %v698, 6.0
      %v731 = vmin.f32 %v699, 6.0
      %v732 = vmin.f32 %v700, 6.0
      %v733 = vmin.f32 %v701, 6.0
      %v734 = vmin.f32 %v702, 6.0
      %v735 = vmin.f32 %v703, 6.0
      %v736 = vmin.f32 %v704, 6.0
      %v737 = vmin.f32 %v705, 6.0
      %v738 = vmin.f32 %v706, 6.0
      %v739 = vmin.f32 %v707, 6.0
      %v740 = vmin.f32 %v708, 6.0
      %v741 = vmin.f32 %v709, 6.0
      %v742 = vmin.f32 %v710, 6.0
      %v743 = vmin.f32 %v711, 6.0
      %v744 = vmin.f32 %v712, 6.0
      %v745 = vmin.f32 %v713, 6.0
      %v746 = vmin.f32 %v714, 6.0
      %v747 = vmin.f32 %v715, 6.0
      %v748 = vmin.f32 %v716, 6.0
      %v749 = vmin.f32 %v717, 6.0
      %v750 = vmin.f32 %v718, 6.0
      %v751 = vmin.f32 %v719, 6.0
      %v752 = vmin.f32 %v720, 6.0
      %v753 = vmin.f32 %v721, 6.0
      %v754 = vmin.f32 %v722, 6.0
      %v755 = vmin.f32 %v723, 6.0
      %vm756 = vcmask 195584
      %757 = vst.msk [vmem:[#allocation2] sm:$0xff] %vm756, 0.0
      %758 = vst.msk [vmem:[#allocation2 + $0x8] sm:$0xff] %vm756, 0.0
      %vm759 = vcmask 189440
      %760 = vst.msk [vmem:[#allocation2 + $0x10] sm:$0x3] %vm759, 0.0
      %s761 = scalar_lea.vmem [#allocation2], 408
      %762 = vst.msk [vmem:[%s761] sm:$0xff] %vm756, 0.0
      %763 = vst.msk [vmem:[%s761 + $0x8] sm:$0xff] %vm756, 0.0
      %764 = vst.msk [vmem:[%s761 + $0x10] sm:$0x3] %vm759, 0.0
      %vm797 = vcmask 1040384
      %v798 = vrot.slane %v724, 7
      %v799 = vrot.slane %v725, 7
      %v800 = vsel %vm797, %v798, %v799
      %v801 = vrot.slane %v726, 7
      %v802 = vrot.slane %v727, 7
      %v803 = vsel %vm797, %v801, %v802
      %v804 = vrot.slane %v728, 7
      %v805 = vrot.slane %v729, 7
      %v806 = vsel %vm797, %v804, %v805
      %v807 = vrot.slane %v730, 7
      %v808 = vrot.slane %v731, 7
      %v809 = vsel %vm797, %v807, %v808
      %v810 = vrot.slane %v732, 7
      %v811 = vrot.slane %v733, 7
      %v812 = vsel %vm797, %v810, %v811
      %v813 = vrot.slane %v734, 7
      %v814 = vrot.slane %v735, 7
      %v815 = vsel %vm797, %v813, %v814
      %v816 = vrot.slane %v736, 7
      %v817 = vrot.slane %v737, 7
      %v818 = vsel %vm797, %v816, %v817
      %v819 = vrot.slane %v738, 7
      %v820 = vrot.slane %v739, 7
      %v821 = vsel %vm797, %v819, %v820
      %v822 = vrot.slane %v740, 7
      %v823 = vrot.slane %v741, 7
      %v824 = vsel %vm797, %v822, %v823
      %v825 = vrot.slane %v742, 7
      %v826 = vrot.slane %v743, 7
      %v827 = vsel %vm797, %v825, %v826
      %v828 = vrot.slane %v744, 7
      %v829 = vrot.slane %v745, 7
      %v830 = vsel %vm797, %v828, %v829
      %v831 = vrot.slane %v746, 7
      %v832 = vrot.slane %v747, 7
      %v833 = vsel %vm797, %v831, %v832
      %v834 = vrot.slane %v748, 7
      %v835 = vrot.slane %v749, 7
      %v836 = vsel %vm797, %v834, %v835
      %v837 = vrot.slane %v750, 7
      %v838 = vrot.slane %v751, 7
      %v839 = vsel %vm797, %v837, %v838
      %v840 = vrot.slane %v752, 7
      %v841 = vrot.slane %v753, 7
      %v842 = vsel %vm797, %v840, %v841
      %v843 = vrot.slane %v754, 7
      %v844 = vrot.slane %v755, 7
      %v845 = vsel %vm797, %v843, %v844
      %v894 = vsel %vm797, 0.0, %v798
      %v895 = vsel %vm797, 0.0, %v801
      %v896 = vsel %vm797, 0.0, %v804
      %v897 = vsel %vm797, 0.0, %v807
      %v898 = vsel %vm797, 0.0, %v810
      %v899 = vsel %vm797, 0.0, %v813
      %v900 = vsel %vm797, 0.0, %v816
      %v901 = vsel %vm797, 0.0, %v819
      %v902 = vsel %vm797, 0.0, %v822
      %v903 = vsel %vm797, 0.0, %v825
      %v904 = vsel %vm797, 0.0, %v828
      %v905 = vsel %vm797, 0.0, %v831
      %v906 = vsel %vm797, 0.0, %v834
      %v907 = vsel %vm797, 0.0, %v837
      %v908 = vsel %vm797, 0.0, %v840
      %v909 = vsel %vm797, 0.0, %v843
      %v910 = vsel %vm797, %v799, 0.0
      %v911 = vsel %vm797, %v802, 0.0
      %v912 = vsel %vm797, %v805, 0.0
      %v913 = vsel %vm797, %v808, 0.0
      %v914 = vsel %vm797, %v811, 0.0
      %v915 = vsel %vm797, %v814, 0.0
      %v916 = vsel %vm797, %v817, 0.0
      %v917 = vsel %vm797, %v820, 0.0
      %v918 = vsel %vm797, %v823, 0.0
      %v919 = vsel %vm797, %v826, 0.0
      %v920 = vsel %vm797, %v829, 0.0
      %v921 = vsel %vm797, %v832, 0.0
      %v922 = vsel %vm797, %v835, 0.0
      %v923 = vsel %vm797, %v838, 0.0
      %v924 = vsel %vm797, %v841, 0.0
      %v925 = vsel %vm797, %v844, 0.0
      %s926 = scalar_lea.vmem [#allocation2], 24
      %927 = vst.msk [vmem:[%s926] sm:$0xff] %vm756, %v894
      %928 = vst.msk [vmem:[%s926 + $0x8] sm:$0xff] %vm756, %v800
      %929 = vst.msk [vmem:[%s926 + $0x10] sm:$0x3] %vm759, %v910
      %930 = vst.msk [vmem:[%s926 + $0x18] sm:$0xff] %vm756, %v895
      %931 = vst.msk [vmem:[%s926 + $0x20] sm:$0xff] %vm756, %v803
      %932 = vst.msk [vmem:[%s926 + $0x28] sm:$0x3] %vm759, %v911
      %933 = vst.msk [vmem:[%s926 + $0x30] sm:$0xff] %vm756, %v896
      %934 = vst.msk [vmem:[%s926 + $0x38] sm:$0xff] %vm756, %v806
      %935 = vst.msk [vmem:[%s926 + $0x40] sm:$0x3] %vm759, %v912
      %936 = vst.msk [vmem:[%s926 + $0x48] sm:$0xff] %vm756, %v897
      %937 = vst.msk [vmem:[%s926 + $0x50] sm:$0xff] %vm756, %v809
      %938 = vst.msk [vmem:[%s926 + $0x58] sm:$0x3] %vm759, %v913
      %939 = vst.msk [vmem:[%s926 + $0x60] sm:$0xff] %vm756, %v898
      %940 = vst.msk [vmem:[%s926 + $0x68] sm:$0xff] %vm756, %v812
      %941 = vst.msk [vmem:[%s926 + $0x70] sm:$0x3] %vm759, %v914
      %942 = vst.msk [vmem:[%s926 + $0x78] sm:$0xff] %vm756, %v899
      %943 = vst.msk [vmem:[%s926 + $0x80] sm:$0xff] %vm756, %v815
      %944 = vst.msk [vmem:[%s926 + $0x88] sm:$0x3] %vm759, %v915
      %945 = vst.msk [vmem:[%s926 + $0x90] sm:$0xff] %vm756, %v900
      %946 = vst.msk [vmem:[%s926 + $0x98] sm:$0xff] %vm756, %v818
      %947 = vst.msk [vmem:[%s926 + $0xa0] sm:$0x3] %vm759, %v916
      %948 = vst.msk [vmem:[%s926 + $0xa8] sm:$0xff] %vm756, %v901
      %949 = vst.msk [vmem:[%s926 + $0xb0] sm:$0xff] %vm756, %v821
      %950 = vst.msk [vmem:[%s926 + $0xb8] sm:$0x3] %vm759, %v917
      %951 = vst.msk [vmem:[%s926 + $0xc0] sm:$0xff] %vm756, %v902
      %952 = vst.msk [vmem:[%s926 + $0xc8] sm:$0xff] %vm756, %v824
      %953 = vst.msk [vmem:[%s926 + $0xd0] sm:$0x3] %vm759, %v918
      %954 = vst.msk [vmem:[%s926 + $0xd8] sm:$0xff] %vm756, %v903
      %955 = vst.msk [vmem:[%s926 + $0xe0] sm:$0xff] %vm756, %v827
      %956 = vst.msk [vmem:[%s926 + $0xe8] sm:$0x3] %vm759, %v919
      %957 = vst.msk [vmem:[%s926 + $0xf0] sm:$0xff] %vm756, %v904
      %958 = vst.msk [vmem:[%s926 + $0xf8] sm:$0xff] %vm756, %v830
      %959 = vst.msk [vmem:[%s926 + $0x100] sm:$0x3] %vm759, %v920
      %960 = vst.msk [vmem:[%s926 + $0x108] sm:$0xff] %vm756, %v905
      %961 = vst.msk [vmem:[%s926 + $0x110] sm:$0xff] %vm756, %v833
      %962 = vst.msk [vmem:[%s926 + $0x118] sm:$0x3] %vm759, %v921
      %963 = vst.msk [vmem:[%s926 + $0x120] sm:$0xff] %vm756, %v906
      %964 = vst.msk [vmem:[%s926 + $0x128] sm:$0xff] %vm756, %v836
      %965 = vst.msk [vmem:[%s926 + $0x130] sm:$0x3] %vm759, %v922
      %966 = vst.msk [vmem:[%s926 + $0x138] sm:$0xff] %vm756, %v907
      %967 = vst.msk [vmem:[%s926 + $0x140] sm:$0xff] %vm756, %v839
      %968 = vst.msk [vmem:[%s926 + $0x148] sm:$0x3] %vm759, %v923
      %969 = vst.msk [vmem:[%s926 + $0x150] sm:$0xff] %vm756, %v908
      %970 = vst.msk [vmem:[%s926 + $0x158] sm:$0xff] %vm756, %v842
      %971 = vst.msk [vmem:[%s926 + $0x160] sm:$0x3] %vm759, %v924
      %972 = vst.msk [vmem:[%s926 + $0x168] sm:$0xff] %vm756, %v909
      %973 = vst.msk [vmem:[%s926 + $0x170] sm:$0xff] %vm756, %v845
      %974 = vst.msk [vmem:[%s926 + $0x178] sm:$0x3] %vm759, %v925
      %v975 = vld [vmem:[%s3] sm:$0x7]
      %v976 = vld [vmem:[%s3 + $0x4] sm:$0x7]
      %v977 = vld [vmem:[%s3 + $0x8] sm:$0x7]
      %v978 = vld [vmem:[%s4] sm:$0x1]
      %v979 = vld [vmem:[%s5] sm:$0xf]
      %v980 = vld [vmem:[%s6] sm:$0xf]
      %v981 = vld [vmem:[#allocation2] sm:$0xff]
      %v982 = vld [vmem:[#allocation2 + $0x8] sm:$0xff]
      %v983 = vld [vmem:[#allocation2 + $0x18] sm:$0xff]
      %v984 = vld [vmem:[#allocation2 + $0x20] sm:$0xff]
      %v985 = vld [vmem:[#allocation2 + $0x30] sm:$0xff]
      %v986 = vld [vmem:[#allocation2 + $0x38] sm:$0xff]
      %v987 = vld [vmem:[#allocation2 + $0x48] sm:$0xff]
      %v988 = vld [vmem:[#allocation2 + $0x50] sm:$0xff]
      %v989 = vld [vmem:[#allocation2 + $0x60] sm:$0xff]
      %v990 = vld [vmem:[#allocation2 + $0x68] sm:$0xff]
      %v991 = vld [vmem:[#allocation2 + $0x78] sm:$0xff]
      %v992 = vld [vmem:[#allocation2 + $0x80] sm:$0xff]
      %v993 = vld [vmem:[#allocation2 + $0x90] sm:$0xff]
      %v994 = vld [vmem:[#allocation2 + $0x98] sm:$0xff]
      %v995 = vld [vmem:[#allocation2 + $0xa8] sm:$0xff]
      %v996 = vld [vmem:[#allocation2 + $0xb0] sm:$0xff]
      %v997 = vlaneseq
      %v998 = vshrl.u32 %v997, 7
      %v999 = vsub.s32 0, %v998
      %v1000 = vrot.slane %v975, %v999
      %v1001 = vmul.f32 %v981, %v1000
      %v1002 = vmul.f32 %v982, %v1000
      %v1003 = vmul.f32 %v983, %v1000
      %v1004 = vmul.f32 %v984, %v1000
      %v1005 = vmul.f32 %v985, %v1000
      %v1006 = vmul.f32 %v986, %v1000
      %v1007 = vmul.f32 %v987, %v1000
      %v1008 = vmul.f32 %v988, %v1000
      %v1009 = vmul.f32 %v989, %v1000
      %v1010 = vmul.f32 %v990, %v1000
      %v1011 = vmul.f32 %v991, %v1000
      %v1012 = vmul.f32 %v992, %v1000
      %v1013 = vmul.f32 %v993, %v1000
      %v1014 = vmul.f32 %v994, %v1000
      %v1015 = vmul.f32 %v995, %v1000
      %v1016 = vmul.f32 %v996, %v1000
      %v1017 = vadd.f32 %v1001, 0.0
      %v1018 = vadd.f32 %v1002, 0.0
      %v1019 = vadd.f32 %v1003, 0.0
      %v1020 = vadd.f32 %v1004, 0.0
      %v1021 = vadd.f32 %v1005, 0.0
      %v1022 = vadd.f32 %v1006, 0.0
      %v1023 = vadd.f32 %v1007, 0.0
      %v1024 = vadd.f32 %v1008, 0.0
      %v1025 = vadd.f32 %v1009, 0.0
      %v1026 = vadd.f32 %v1010, 0.0
      %v1027 = vadd.f32 %v1011, 0.0
      %v1028 = vadd.f32 %v1012, 0.0
      %v1029 = vadd.f32 %v1013, 0.0
      %v1030 = vadd.f32 %v1014, 0.0
      %v1031 = vadd.f32 %v1015, 0.0
      %v1032 = vadd.f32 %v1016, 0.0
      %v1033 = vld [vmem:[#allocation2 + $0x1] sm:$0xff]
      %v1034 = vld [vmem:[#allocation2 + $0x9] sm:$0xff]
      %v1035 = vld [vmem:[#allocation2 + $0x19] sm:$0xff]
      %v1036 = vld [vmem:[#allocation2 + $0x21] sm:$0xff]
      %v1037 = vld [vmem:[#allocation2 + $0x31] sm:$0xff]
      %v1038 = vld [vmem:[#allocation2 + $0x39] sm:$0xff]
      %v1039 = vld [vmem:[#allocation2 + $0x49] sm:$0xff]
      %v1040 = vld [vmem:[#allocation2 + $0x51] sm:$0xff]
      %v1041 = vld [vmem:[#allocation2 + $0x61] sm:$0xff]
      %v1042 = vld [vmem:[#allocation2 + $0x69] sm:$0xff]
      %v1043 = vld [vmem:[#allocation2 + $0x79] sm:$0xff]
      %v1044 = vld [vmem:[#allocation2 + $0x81] sm:$0xff]
      %v1045 = vld [vmem:[#allocation2 + $0x91] sm:$0xff]
      %v1046 = vld [vmem:[#allocation2 + $0x99] sm:$0xff]
      %v1047 = vld [vmem:[#allocation2 + $0xa9] sm:$0xff]
      %v1048 = vld [vmem:[#allocation2 + $0xb1] sm:$0xff]
      %v1049 = vlaneseq
      %v1050 = vshrl.u32 %v1049, 7
      %v1051 = vsub.s32 1, %v1050
      %v1052 = vrot.slane %v975, %v1051
      %v1053 = vmul.f32 %v1033, %v1052
      %v1054 = vmul.f32 %v1034, %v1052
      %v1055 = vmul.f32 %v1035, %v1052
      %v1056 = vmul.f32 %v1036, %v1052
      %v1057 = vmul.f32 %v1037, %v1052
      %v1058 = vmul.f32 %v1038, %v1052
      %v1059 = vmul.f32 %v1039, %v1052
      %v1060 = vmul.f32 %v1040, %v1052
      %v1061 = vmul.f32 %v1041, %v1052
      %v1062 = vmul.f32 %v1042, %v1052
      %v1063 = vmul.f32 %v1043, %v1052
      %v1064 = vmul.f32 %v1044, %v1052
      %v1065 = vmul.f32 %v1045, %v1052
      %v1066 = vmul.f32 %v1046, %v1052
      %v1067 = vmul.f32 %v1047, %v1052
      %v1068 = vmul.f32 %v1048, %v1052
      %v1069 = vadd.f32 %v1017, %v1053
      %v1070 = vadd.f32 %v1018, %v1054
      %v1071 = vadd.f32 %v1019, %v1055
      %v1072 = vadd.f32 %v1020, %v1056
      %v1073 = vadd.f32 %v1021, %v1057
      %v1074 = vadd.f32 %v1022, %v1058
      %v1075 = vadd.f32 %v1023, %v1059
      %v1076 = vadd.f32 %v1024, %v1060
      %v1077 = vadd.f32 %v1025, %v1061
      %v1078 = vadd.f32 %v1026, %v1062
      %v1079 = vadd.f32 %v1027, %v1063
      %v1080 = vadd.f32 %v1028, %v1064
      %v1081 = vadd.f32 %v1029, %v1065
      %v1082 = vadd.f32 %v1030, %v1066
      %v1083 = vadd.f32 %v1031, %v1067
      %v1084 = vadd.f32 %v1032, %v1068
      %v1085 = vld [vmem:[#allocation2 + $0x2] sm:$0xff]
      %v1086 = vld [vmem:[#allocation2 + $0xa] sm:$0xff]
      %v1087 = vld [vmem:[#allocation2 + $0x1a] sm:$0xff]
      %v1088 = vld [vmem:[#allocation2 + $0x22] sm:$0xff]
      %v1089 = vld [vmem:[#allocation2 + $0x32] sm:$0xff]
      %v1090 = vld [vmem:[#allocation2 + $0x3a] sm:$0xff]
      %v1091 = vld [vmem:[#allocation2 + $0x4a] sm:$0xff]
      %v1092 = vld [vmem:[#allocation2 + $0x52] sm:$0xff]
      %v1093 = vld [vmem:[#allocation2 + $0x62] sm:$0xff]
      %v1094 = vld [vmem:[#allocation2 + $0x6a] sm:$0xff]
      %v1095 = vld [vmem:[#allocation2 + $0x7a] sm:$0xff]
      %v1096 = vld [vmem:[#allocation2 + $0x82] sm:$0xff]
      %v1097 = vld [vmem:[#allocation2 + $0x92] sm:$0xff]
      %v1098 = vld [vmem:[#allocation2 + $0x9a] sm:$0xff]
      %v1099 = vld [vmem:[#allocation2 + $0xaa] sm:$0xff]
      %v1100 = vld [vmem:[#allocation2 + $0xb2] sm:$0xff]
      %v1101 = vlaneseq
      %v1102 = vshrl.u32 %v1101, 7
      %v1103 = vsub.s32 2, %v1102
      %v1104 = vrot.slane %v975, %v1103
      %v1105 = vmul.f32 %v1085, %v1104
      %v1106 = vmul.f32 %v1086, %v1104
      %v1107 = vmul.f32 %v1087, %v1104
      %v1108 = vmul.f32 %v1088, %v1104
      %v1109 = vmul.f32 %v1089, %v1104
      %v1110 = vmul.f32 %v1090, %v1104
      %v1111 = vmul.f32 %v1091, %v1104
      %v1112 = vmul.f32 %v1092, %v1104
      %v1113 = vmul.f32 %v1093, %v1104
      %v1114 = vmul.f32 %v1094, %v1104
      %v1115 = vmul.f32 %v1095, %v1104
      %v1116 = vmul.f32 %v1096, %v1104
      %v1117 = vmul.f32 %v1097, %v1104
      %v1118 = vmul.f32 %v1098, %v1104
      %v1119 = vmul.f32 %v1099, %v1104
      %v1120 = vmul.f32 %v1100, %v1104
      %v1121 = vadd.f32 %v1069, %v1105
      %v1122 = vadd.f32 %v1070, %v1106
      %v1123 = vadd.f32 %v1071, %v1107
      %v1124 = vadd.f32 %v1072, %v1108
      %v1125 = vadd.f32 %v1073, %v1109
      %v1126 = vadd.f32 %v1074, %v1110
      %v1127 = vadd.f32 %v1075, %v1111
      %v1128 = vadd.f32 %v1076, %v1112
      %v1129 = vadd.f32 %v1077, %v1113
      %v1130 = vadd.f32 %v1078, %v1114
      %v1131 = vadd.f32 %v1079, %v1115
      %v1132 = vadd.f32 %v1080, %v1116
      %v1133 = vadd.f32 %v1081, %v1117
      %v1134 = vadd.f32 %v1082, %v1118
      %v1135 = vadd.f32 %v1083, %v1119
      %v1136 = vadd.f32 %v1084, %v1120
      %v1137 = vld [vmem:[%s926] sm:$0xff]
      %v1138 = vld [vmem:[%s926 + $0x8] sm:$0xff]
      %v1139 = vld [vmem:[%s926 + $0x18] sm:$0xff]
      %v1140 = vld [vmem:[%s926 + $0x20] sm:$0xff]
      %v1141 = vld [vmem:[%s926 + $0x30] sm:$0xff]
      %v1142 = vld [vmem:[%s926 + $0x38] sm:$0xff]
      %v1143 = vld [vmem:[%s926 + $0x48] sm:$0xff]
      %v1144 = vld [vmem:[%s926 + $0x50] sm:$0xff]
      %v1145 = vld [vmem:[%s926 + $0x60] sm:$0xff]
      %v1146 = vld [vmem:[%s926 + $0x68] sm:$0xff]
      %v1147 = vld [vmem:[%s926 + $0x78] sm:$0xff]
      %v1148 = vld [vmem:[%s926 + $0x80] sm:$0xff]
      %v1149 = vld [vmem:[%s926 + $0x90] sm:$0xff]
      %v1150 = vld [vmem:[%s926 + $0x98] sm:$0xff]
      %v1151 = vld [vmem:[%s926 + $0xa8] sm:$0xff]
      %v1152 = vld [vmem:[%s926 + $0xb0] sm:$0xff]
      %v1153 = vlaneseq
      %v1154 = vshrl.u32 %v1153, 7
      %v1155 = vsub.s32 0, %v1154
      %v1156 = vrot.slane %v976, %v1155
      %v1157 = vmul.f32 %v1137, %v1156
      %v1158 = vmul.f32 %v1138, %v1156
      %v1159 = vmul.f32 %v1139, %v1156
      %v1160 = vmul.f32 %v1140, %v1156
      %v1161 = vmul.f32 %v1141, %v1156
      %v1162 = vmul.f32 %v1142, %v1156
      %v1163 = vmul.f32 %v1143, %v1156
      %v1164 = vmul.f32 %v1144, %v1156
      %v1165 = vmul.f32 %v1145, %v1156
      %v1166 = vmul.f32 %v1146, %v1156
      %v1167 = vmul.f32 %v1147, %v1156
      %v1168 = vmul.f32 %v1148, %v1156
      %v1169 = vmul.f32 %v1149, %v1156
      %v1170 = vmul.f32 %v1150, %v1156
      %v1171 = vmul.f32 %v1151, %v1156
      %v1172 = vmul.f32 %v1152, %v1156
      %v1173 = vadd.f32 %v1121, %v1157
      %v1174 = vadd.f32 %v1122, %v1158
      %v1175 = vadd.f32 %v1123, %v1159
      %v1176 = vadd.f32 %v1124, %v1160
      %v1177 = vadd.f32 %v1125, %v1161
      %v1178 = vadd.f32 %v1126, %v1162
      %v1179 = vadd.f32 %v1127, %v1163
      %v1180 = vadd.f32 %v1128, %v1164
      %v1181 = vadd.f32 %v1129, %v1165
      %v1182 = vadd.f32 %v1130, %v1166
      %v1183 = vadd.f32 %v1131, %v1167
      %v1184 = vadd.f32 %v1132, %v1168
      %v1185 = vadd.f32 %v1133, %v1169
      %v1186 = vadd.f32 %v1134, %v1170
      %v1187 = vadd.f32 %v1135, %v1171
      %v1188 = vadd.f32 %v1136, %v1172
      %v1189 = vld [vmem:[%s926 + $0x1] sm:$0xff]
      %v1190 = vld [vmem:[%s926 + $0x9] sm:$0xff]
      %v1191 = vld [vmem:[%s926 + $0x19] sm:$0xff]
      %v1192 = vld [vmem:[%s926 + $0x21] sm:$0xff]
      %v1193 = vld [vmem:[%s926 + $0x31] sm:$0xff]
      %v1194 = vld [vmem:[%s926 + $0x39] sm:$0xff]
      %v1195 = vld [vmem:[%s926 + $0x49] sm:$0xff]
      %v1196 = vld [vmem:[%s926 + $0x51] sm:$0xff]
      %v1197 = vld [vmem:[%s926 + $0x61] sm:$0xff]
      %v1198 = vld [vmem:[%s926 + $0x69] sm:$0xff]
      %v1199 = vld [vmem:[%s926 + $0x79] sm:$0xff]
      %v1200 = vld [vmem:[%s926 + $0x81] sm:$0xff]
      %v1201 = vld [vmem:[%s926 + $0x91] sm:$0xff]
      %v1202 = vld [vmem:[%s926 + $0x99] sm:$0xff]
      %v1203 = vld [vmem:[%s926 + $0xa9] sm:$0xff]
      %v1204 = vld [vmem:[%s926 + $0xb1] sm:$0xff]
      %v1205 = vlaneseq
      %v1206 = vshrl.u32 %v1205, 7
      %v1207 = vsub.s32 1, %v1206
      %v1208 = vrot.slane %v976, %v1207
      %v1209 = vmul.f32 %v1189, %v1208
      %v1210 = vmul.f32 %v1190, %v1208
      %v1211 = vmul.f32 %v1191, %v1208
      %v1212 = vmul.f32 %v1192, %v1208
      %v1213 = vmul.f32 %v1193, %v1208
      %v1214 = vmul.f32 %v1194, %v1208
      %v1215 = vmul.f32 %v1195, %v1208
      %v1216 = vmul.f32 %v1196, %v1208
      %v1217 = vmul.f32 %v1197, %v1208
      %v1218 = vmul.f32 %v1198, %v1208
      %v1219 = vmul.f32 %v1199, %v1208
      %v1220 = vmul.f32 %v1200, %v1208
      %v1221 = vmul.f32 %v1201, %v1208
      %v1222 = vmul.f32 %v1202, %v1208
      %v1223 = vmul.f32 %v1203, %v1208
      %v1224 = vmul.f32 %v1204, %v1208
      %v1225 = vadd.f32 %v1173, %v1209
      %v1226 = vadd.f32 %v1174, %v1210
      %v1227 = vadd.f32 %v1175, %v1211
      %v1228 = vadd.f32 %v1176, %v1212
      %v1229 = vadd.f32 %v1177, %v1213
      %v1230 = vadd.f32 %v1178, %v1214
      %v1231 = vadd.f32 %v1179, %v1215
      %v1232 = vadd.f32 %v1180, %v1216
      %v1233 = vadd.f32 %v1181, %v1217
      %v1234 = vadd.f32 %v1182, %v1218
      %v1235 = vadd.f32 %v1183, %v1219
      %v1236 = vadd.f32 %v1184, %v1220
      %v1237 = vadd.f32 %v1185, %v1221
      %v1238 = vadd.f32 %v1186, %v1222
      %v1239 = vadd.f32 %v1187, %v1223
      %v1240 = vadd.f32 %v1188, %v1224
      %v1241 = vld [vmem:[%s926 + $0x2] sm:$0xff]
      %v1242 = vld [vmem:[%s926 + $0xa] sm:$0xff]
      %v1243 = vld [vmem:[%s926 + $0x1a] sm:$0xff]
      %v1244 = vld [vmem:[%s926 + $0x22] sm:$0xff]
      %v1245 = vld [vmem:[%s926 + $0x32] sm:$0xff]
      %v1246 = vld [vmem:[%s926 + $0x3a] sm:$0xff]
      %v1247 = vld [vmem:[%s926 + $0x4a] sm:$0xff]
      %v1248 = vld [vmem:[%s926 + $0x52] sm:$0xff]
      %v1249 = vld [vmem:[%s926 + $0x62] sm:$0xff]
      %v1250 = vld [vmem:[%s926 + $0x6a] sm:$0xff]
      %v1251 = vld [vmem:[%s926 + $0x7a] sm:$0xff]
      %v1252 = vld [vmem:[%s926 + $0x82] sm:$0xff]
      %v1253 = vld [vmem:[%s926 + $0x92] sm:$0xff]
      %v1254 = vld [vmem:[%s926 + $0x9a] sm:$0xff]
      %v1255 = vld [vmem:[%s926 + $0xaa] sm:$0xff]
      %v1256 = vld [vmem:[%s926 + $0xb2] sm:$0xff]
      %v1257 = vlaneseq
      %v1258 = vshrl.u32 %v1257, 7
      %v1259 = vsub.s32 2, %v1258
      %v1260 = vrot.slane %v976, %v1259
      %v1261 = vmul.f32 %v1241, %v1260
      %v1262 = vmul.f32 %v1242, %v1260
      %v1263 = vmul.f32 %v1243, %v1260
      %v1264 = vmul.f32 %v1244, %v1260
      %v1265 = vmul.f32 %v1245, %v1260
      %v1266 = vmul.f32 %v1246, %v1260
      %v1267 = vmul.f32 %v1247, %v1260
      %v1268 = vmul.f32 %v1248, %v1260
      %v1269 = vmul.f32 %v1249, %v1260
      %v1270 = vmul.f32 %v1250, %v1260
      %v1271 = vmul.f32 %v1251, %v1260
      %v1272 = vmul.f32 %v1252, %v1260
      %v1273 = vmul.f32 %v1253, %v1260
      %v1274 = vmul.f32 %v1254, %v1260
      %v1275 = vmul.f32 %v1255, %v1260
      %v1276 = vmul.f32 %v1256, %v1260
      %v1277 = vadd.f32 %v1225, %v1261
      %v1278 = vadd.f32 %v1226, %v1262
      %v1279 = vadd.f32 %v1227, %v1263
      %v1280 = vadd.f32 %v1228, %v1264
      %v1281 = vadd.f32 %v1229, %v1265
      %v1282 = vadd.f32 %v1230, %v1266
      %v1283 = vadd.f32 %v1231, %v1267
      %v1284 = vadd.f32 %v1232, %v1268
      %v1285 = vadd.f32 %v1233, %v1269
      %v1286 = vadd.f32 %v1234, %v1270
      %v1287 = vadd.f32 %v1235, %v1271
      %v1288 = vadd.f32 %v1236, %v1272
      %v1289 = vadd.f32 %v1237, %v1273
      %v1290 = vadd.f32 %v1238, %v1274
      %v1291 = vadd.f32 %v1239, %v1275
      %v1292 = vadd.f32 %v1240, %v1276
      %s1293 = scalar_lea.vmem [#allocation2], 48
      %v1294 = vld [vmem:[%s1293] sm:$0xff]
      %v1295 = vld [vmem:[%s1293 + $0x8] sm:$0xff]
      %v1296 = vld [vmem:[%s1293 + $0x18] sm:$0xff]
      %v1297 = vld [vmem:[%s1293 + $0x20] sm:$0xff]
      %v1298 = vld [vmem:[%s1293 + $0x30] sm:$0xff]
      %v1299 = vld [vmem:[%s1293 + $0x38] sm:$0xff]
      %v1300 = vld [vmem:[%s1293 + $0x48] sm:$0xff]
      %v1301 = vld [vmem:[%s1293 + $0x50] sm:$0xff]
      %v1302 = vld [vmem:[%s1293 + $0x60] sm:$0xff]
      %v1303 = vld [vmem:[%s1293 + $0x68] sm:$0xff]
      %v1304 = vld [vmem:[%s1293 + $0x78] sm:$0xff]
      %v1305 = vld [vmem:[%s1293 + $0x80] sm:$0xff]
      %v1306 = vld [vmem:[%s1293 + $0x90] sm:$0xff]
      %v1307 = vld [vmem:[%s1293 + $0x98] sm:$0xff]
      %v1308 = vld [vmem:[%s1293 + $0xa8] sm:$0xff]
      %v1309 = vld [vmem:[%s1293 + $0xb0] sm:$0xff]
      %v1310 = vlaneseq
      %v1311 = vshrl.u32 %v1310, 7
      %v1312 = vsub.s32 0, %v1311
      %v1313 = vrot.slane %v977, %v1312
      %v1314 = vmul.f32 %v1294, %v1313
      %v1315 = vmul.f32 %v1295, %v1313
      %v1316 = vmul.f32 %v1296, %v1313
      %v1317 = vmul.f32 %v1297, %v1313
      %v1318 = vmul.f32 %v1298, %v1313
      %v1319 = vmul.f32 %v1299, %v1313
      %v1320 = vmul.f32 %v1300, %v1313
      %v1321 = vmul.f32 %v1301, %v1313
      %v1322 = vmul.f32 %v1302, %v1313
      %v1323 = vmul.f32 %v1303, %v1313
      %v1324 = vmul.f32 %v1304, %v1313
      %v1325 = vmul.f32 %v1305, %v1313
      %v1326 = vmul.f32 %v1306, %v1313
      %v1327 = vmul.f32 %v1307, %v1313
      %v1328 = vmul.f32 %v1308, %v1313
      %v1329 = vmul.f32 %v1309, %v1313
      %v1330 = vadd.f32 %v1277, %v1314
      %v1331 = vadd.f32 %v1278, %v1315
      %v1332 = vadd.f32 %v1279, %v1316
      %v1333 = vadd.f32 %v1280, %v1317
      %v1334 = vadd.f32 %v1281, %v1318
      %v1335 = vadd.f32 %v1282, %v1319
      %v1336 = vadd.f32 %v1283, %v1320
      %v1337 = vadd.f32 %v1284, %v1321
      %v1338 = vadd.f32 %v1285, %v1322
      %v1339 = vadd.f32 %v1286, %v1323
      %v1340 = vadd.f32 %v1287, %v1324
      %v1341 = vadd.f32 %v1288, %v1325
      %v1342 = vadd.f32 %v1289, %v1326
      %v1343 = vadd.f32 %v1290, %v1327
      %v1344 = vadd.f32 %v1291, %v1328
      %v1345 = vadd.f32 %v1292, %v1329
      %v1346 = vld [vmem:[%s1293 + $0x1] sm:$0xff]
      %v1347 = vld [vmem:[%s1293 + $0x9] sm:$0xff]
      %v1348 = vld [vmem:[%s1293 + $0x19] sm:$0xff]
      %v1349 = vld [vmem:[%s1293 + $0x21] sm:$0xff]
      %v1350 = vld [vmem:[%s1293 + $0x31] sm:$0xff]
      %v1351 = vld [vmem:[%s1293 + $0x39] sm:$0xff]
      %v1352 = vld [vmem:[%s1293 + $0x49] sm:$0xff]
      %v1353 = vld [vmem:[%s1293 + $0x51] sm:$0xff]
      %v1354 = vld [vmem:[%s1293 + $0x61] sm:$0xff]
      %v1355 = vld [vmem:[%s1293 + $0x69] sm:$0xff]
      %v1356 = vld [vmem:[%s1293 + $0x79] sm:$0xff]
      %v1357 = vld [vmem:[%s1293 + $0x81] sm:$0xff]
      %v1358 = vld [vmem:[%s1293 + $0x91] sm:$0xff]
      %v1359 = vld [vmem:[%s1293 + $0x99] sm:$0xff]
      %v1360 = vld [vmem:[%s1293 + $0xa9] sm:$0xff]
      %v1361 = vld [vmem:[%s1293 + $0xb1] sm:$0xff]
      %v1362 = vlaneseq
      %v1363 = vshrl.u32 %v1362, 7
      %v1364 = vsub.s32 1, %v1363
      %v1365 = vrot.slane %v977, %v1364
      %v1366 = vmul.f32 %v1346, %v1365
      %v1367 = vmul.f32 %v1347, %v1365
      %v1368 = vmul.f32 %v1348, %v1365
      %v1369 = vmul.f32 %v1349, %v1365
      %v1370 = vmul.f32 %v1350, %v1365
      %v1371 = vmul.f32 %v1351, %v1365
      %v1372 = vmul.f32 %v1352, %v1365
      %v1373 = vmul.f32 %v1353, %v1365
      %v1374 = vmul.f32 %v1354, %v1365
      %v1375 = vmul.f32 %v1355, %v1365
      %v1376 = vmul.f32 %v1356, %v1365
      %v1377 = vmul.f32 %v1357, %v1365
      %v1378 = vmul.f32 %v1358, %v1365
      %v1379 = vmul.f32 %v1359, %v1365
      %v1380 = vmul.f32 %v1360, %v1365
      %v1381 = vmul.f32 %v1361, %v1365
      %v1382 = vadd.f32 %v1330, %v1366
      %v1383 = vadd.f32 %v1331, %v1367
      %v1384 = vadd.f32 %v1332, %v1368
      %v1385 = vadd.f32 %v1333, %v1369
      %v1386 = vadd.f32 %v1334, %v1370
      %v1387 = vadd.f32 %v1335, %v1371
      %v1388 = vadd.f32 %v1336, %v1372
      %v1389 = vadd.f32 %v1337, %v1373
      %v1390 = vadd.f32 %v1338, %v1374
      %v1391 = vadd.f32 %v1339, %v1375
      %v1392 = vadd.f32 %v1340, %v1376
      %v1393 = vadd.f32 %v1341, %v1377
      %v1394 = vadd.f32 %v1342, %v1378
      %v1395 = vadd.f32 %v1343, %v1379
      %v1396 = vadd.f32 %v1344, %v1380
      %v1397 = vadd.f32 %v1345, %v1381
      %v1398 = vld [vmem:[%s1293 + $0x2] sm:$0xff]
      %v1399 = vld [vmem:[%s1293 + $0xa] sm:$0xff]
      %v1400 = vld [vmem:[%s1293 + $0x1a] sm:$0xff]
      %v1401 = vld [vmem:[%s1293 + $0x22] sm:$0xff]
      %v1402 = vld [vmem:[%s1293 + $0x32] sm:$0xff]
      %v1403 = vld [vmem:[%s1293 + $0x3a] sm:$0xff]
      %v1404 = vld [vmem:[%s1293 + $0x4a] sm:$0xff]
      %v1405 = vld [vmem:[%s1293 + $0x52] sm:$0xff]
      %v1406 = vld [vmem:[%s1293 + $0x62] sm:$0xff]
      %v1407 = vld [vmem:[%s1293 + $0x6a] sm:$0xff]
      %v1408 = vld [vmem:[%s1293 + $0x7a] sm:$0xff]
      %v1409 = vld [vmem:[%s1293 + $0x82] sm:$0xff]
      %v1410 = vld [vmem:[%s1293 + $0x92] sm:$0xff]
      %v1411 = vld [vmem:[%s1293 + $0x9a] sm:$0xff]
      %v1412 = vld [vmem:[%s1293 + $0xaa] sm:$0xff]
      %v1413 = vld [vmem:[%s1293 + $0xb2] sm:$0xff]
      %v1414 = vlaneseq
      %v1415 = vshrl.u32 %v1414, 7
      %v1416 = vsub.s32 2, %v1415
      %v1417 = vrot.slane %v977, %v1416
      %v1418 = vmul.f32 %v1398, %v1417
      %v1419 = vmul.f32 %v1399, %v1417
      %v1420 = vmul.f32 %v1400, %v1417
      %v1421 = vmul.f32 %v1401, %v1417
      %v1422 = vmul.f32 %v1402, %v1417
      %v1423 = vmul.f32 %v1403, %v1417
      %v1424 = vmul.f32 %v1404, %v1417
      %v1425 = vmul.f32 %v1405, %v1417
      %v1426 = vmul.f32 %v1406, %v1417
      %v1427 = vmul.f32 %v1407, %v1417
      %v1428 = vmul.f32 %v1408, %v1417
      %v1429 = vmul.f32 %v1409, %v1417
      %v1430 = vmul.f32 %v1410, %v1417
      %v1431 = vmul.f32 %v1411, %v1417
      %v1432 = vmul.f32 %v1412, %v1417
      %v1433 = vmul.f32 %v1413, %v1417
      %v1434 = vadd.f32 %v1382, %v1418
      %v1435 = vadd.f32 %v1383, %v1419
      %v1436 = vadd.f32 %v1384, %v1420
      %v1437 = vadd.f32 %v1385, %v1421
      %v1438 = vadd.f32 %v1386, %v1422
      %v1439 = vadd.f32 %v1387, %v1423
      %v1440 = vadd.f32 %v1388, %v1424
      %v1441 = vadd.f32 %v1389, %v1425
      %v1442 = vadd.f32 %v1390, %v1426
      %v1443 = vadd.f32 %v1391, %v1427
      %v1444 = vadd.f32 %v1392, %v1428
      %v1445 = vadd.f32 %v1393, %v1429
      %v1446 = vadd.f32 %v1394, %v1430
      %v1447 = vadd.f32 %v1395, %v1431
      %v1448 = vadd.f32 %v1396, %v1432
      %v1449 = vadd.f32 %v1397, %v1433
      %v1451 = vlaneseq
      %v1452 = vshrl.u32 %v1451, 7
      %v1453 = vsub.s32 0, %v1452
      %v1454 = vrot.slane %v978, %v1453
      %v1456 = vadd.f32 %v1434, %v1454
      %v1457 = vadd.f32 %v1435, %v1454
      %v1458 = vadd.f32 %v1436, %v1454
      %v1459 = vadd.f32 %v1437, %v1454
      %v1460 = vadd.f32 %v1438, %v1454
      %v1461 = vadd.f32 %v1439, %v1454
      %v1462 = vadd.f32 %v1440, %v1454
      %v1463 = vadd.f32 %v1441, %v1454
      %v1464 = vadd.f32 %v1442, %v1454
      %v1465 = vadd.f32 %v1443, %v1454
      %v1466 = vadd.f32 %v1444, %v1454
      %v1467 = vadd.f32 %v1445, %v1454
      %v1468 = vadd.f32 %v1446, %v1454
      %v1469 = vadd.f32 %v1447, %v1454
      %v1470 = vadd.f32 %v1448, %v1454
      %v1471 = vadd.f32 %v1449, %v1454
      %v1472 = vmax.f32 %v1456, 0.0
      %v1473 = vmax.f32 %v1457, 0.0
      %v1474 = vmax.f32 %v1458, 0.0
      %v1475 = vmax.f32 %v1459, 0.0
      %v1476 = vmax.f32 %v1460, 0.0
      %v1477 = vmax.f32 %v1461, 0.0
      %v1478 = vmax.f32 %v1462, 0.0
      %v1479 = vmax.f32 %v1463, 0.0
      %v1480 = vmax.f32 %v1464, 0.0
      %v1481 = vmax.f32 %v1465, 0.0
      %v1482 = vmax.f32 %v1466, 0.0
      %v1483 = vmax.f32 %v1467, 0.0
      %v1484 = vmax.f32 %v1468, 0.0
      %v1485 = vmax.f32 %v1469, 0.0
      %v1486 = vmax.f32 %v1470, 0.0
      %v1487 = vmax.f32 %v1471, 0.0
      %v1488 = vmin.f32 %v1472, 6.0
      %v1489 = vmin.f32 %v1473, 6.0
      %v1490 = vmin.f32 %v1474, 6.0
      %v1491 = vmin.f32 %v1475, 6.0
      %v1492 = vmin.f32 %v1476, 6.0
      %v1493 = vmin.f32 %v1477, 6.0
      %v1494 = vmin.f32 %v1478, 6.0
      %v1495 = vmin.f32 %v1479, 6.0
      %v1496 = vmin.f32 %v1480, 6.0
      %v1497 = vmin.f32 %v1481, 6.0
      %v1498 = vmin.f32 %v1482, 6.0
      %v1499 = vmin.f32 %v1483, 6.0
      %v1500 = vmin.f32 %v1484, 6.0
      %v1501 = vmin.f32 %v1485, 6.0
      %v1502 = vmin.f32 %v1486, 6.0
      %v1503 = vmin.f32 %v1487, 6.0
      %1505 = vset.pattern.permute.xlu0 0
      %1506 = vperm.xlu0 %1505, %v980
      %v1507 = vpop.permute.xlu0 %1506
      %v1510 = vsel %vm756, %v979, 0
      %v1513 = vsel %vm756, %v1488, 0
      %v1516 = vsel %vm756, %v1489, 0
      %v1519 = vsel %vm756, %v1490, 0
      %v1522 = vsel %vm756, %v1491, 0
      %v1525 = vsel %vm756, %v1492, 0
      %v1528 = vsel %vm756, %v1493, 0
      %v1531 = vsel %vm756, %v1494, 0
      %v1534 = vsel %vm756, %v1495, 0
      %v1537 = vsel %vm756, %v1496, 0
      %v1540 = vsel %vm756, %v1497, 0
      %v1543 = vsel %vm756, %v1498, 0
      %v1546 = vsel %vm756, %v1499, 0
      %v1549 = vsel %vm756, %v1500, 0
      %v1552 = vsel %vm756, %v1501, 0
      %v1555 = vsel %vm756, %v1502, 0
      %v1558 = vsel %vm756, %v1503, 0
      %1560 = vmatprep.subr.mxu0 0.0
      %1561 = vmatpush1.xpose.msra.mxu0 %v1513
      %1562 = vmatprep.subr.mxu0 0.0
      %1563 = vmatpush1.xpose.msra.mxu0 %v1516
      %1564 = vmatprep.subr.mxu0 0.0
      %1565 = vmatpush1.xpose.msra.mxu0 %v1519
      %1566 = vmatprep.subr.mxu0 0.0
      %1567 = vmatpush1.xpose.msra.mxu0 %v1522
      %1568 = vmatprep.subr.mxu0 0.0
      %1569 = vmatpush1.xpose.msra.mxu0 %v1525
      %1570 = vmatprep.subr.mxu0 0.0
      %1571 = vmatpush1.xpose.msra.mxu0 %v1528
      %1572 = vmatprep.subr.mxu0 0.0
      %1573 = vmatpush1.xpose.msra.mxu0 %v1531
      %1574 = vmatprep.subr.mxu0 0.0
      %1575 = vmatpush1.xpose.msra.mxu0 %v1534
      %1576 = vmatprep.subr.mxu0 0.0
      %1577 = vmatpush1.xpose.msra.mxu0 %v1537
      %1578 = vmatprep.subr.mxu0 0.0
      %1579 = vmatpush1.xpose.msra.mxu0 %v1540
      %1580 = vmatprep.subr.mxu0 0.0
      %1581 = vmatpush1.xpose.msra.mxu0 %v1543
      %1582 = vmatprep.subr.mxu0 0.0
      %1583 = vmatpush1.xpose.msra.mxu0 %v1546
      %1584 = vmatprep.subr.mxu0 0.0
      %1585 = vmatpush1.xpose.msra.mxu0 %v1549
      %1586 = vmatprep.subr.mxu0 0.0
      %1587 = vmatpush1.xpose.msra.mxu0 %v1552
      %1588 = vmatprep.subr.mxu0 0.0
      %1589 = vmatpush1.xpose.msra.mxu0 %v1555
      %1590 = vmatprep.subr.mxu0 0.0
      %1591 = vmatpush1.xpose.msra.mxu0 %v1558
      %1592 = vmatprep.subr.mxu0 0.0
      %1593 = vmatpush1.xpose.msra.mxu0 0.0
      %1594 = vmatprep.subr.mxu0 0.0
      %1595 = vmatpush1.xpose.msra.mxu0 0.0
      %1596 = vmatprep.subr.mxu0 0.0
      %1597 = vmatpush1.xpose.msra.mxu0 0.0
      %1598 = vmatprep.subr.mxu0 0.0
      %1599 = vmatpush1.xpose.msra.mxu0 0.0
      %1600 = vmatprep.subr.mxu0 0.0
      %1601 = vmatpush1.xpose.msra.mxu0 0.0
      %1602 = vmatprep.subr.mxu0 0.0
      %1603 = vmatpush1.xpose.msra.mxu0 0.0
      %1604 = vmatprep.subr.mxu0 0.0
      %1605 = vmatpush1.xpose.msra.mxu0 0.0
      %1606 = vmatprep.subr.mxu0 0.0
      %1607 = vmatpush1.xpose.msra.mxu0 0.0
      %1608 = vmatprep.subr.mxu0 0.0
      %1609 = vmatpush1.xpose.msra.mxu0 0.0
      %1610 = vmatprep.subr.mxu0 0.0
      %1611 = vmatpush1.xpose.msra.mxu0 0.0
      %1612 = vmatprep.subr.mxu0 0.0
      %1613 = vmatpush1.xpose.msra.mxu0 0.0
      %1614 = vmatprep.subr.mxu0 0.0
      %1615 = vmatpush1.xpose.msra.mxu0 0.0
      %1616 = vmatprep.subr.mxu0 0.0
      %1617 = vmatpush1.xpose.msra.mxu0 0.0
      %1618 = vmatprep.subr.mxu0 0.0
      %1619 = vmatpush1.xpose.msra.mxu0 0.0
      %1620 = vmatprep.subr.mxu0 0.0
      %1621 = vmatpush1.xpose.msra.mxu0 0.0
      %1622 = vmatprep.subr.mxu0 0.0
      %1623 = vmatpush1.xpose.msra.mxu0 0.0
      %1624 = vmatprep.mubr.f32.mxu0 0.0
      %1625 = vmatmul.mubr.f32.gmra.mrb[0].mxu0 %v1510
      %v1626 = vpop.f32.mrb[0].mxu0
      %v1627 = vadd.f32 %v1507, %v1626
      %v1628 = vpop.f32.mrb[0].mxu0
      %1629 = vdwg.mxu0
      %v1630 = vld [vmem:[%s320] sm:$0xf]
      %v1631 = vadd.f32 %v1627, %v1630
      %1632 = vst [vmem:[%s325] sm:$0xf] %v1631
      %s1633 = scalar_lea.vmem [#allocation2], 192
      %v1634 = vld [vmem:[%s1633] sm:$0xff]
      %v1635 = vld [vmem:[%s1633 + $0x8] sm:$0xff]
      %v1636 = vld [vmem:[%s1633 + $0x18] sm:$0xff]
      %v1637 = vld [vmem:[%s1633 + $0x20] sm:$0xff]
      %v1638 = vld [vmem:[%s1633 + $0x30] sm:$0xff]
      %v1639 = vld [vmem:[%s1633 + $0x38] sm:$0xff]
      %v1640 = vld [vmem:[%s1633 + $0x48] sm:$0xff]
      %v1641 = vld [vmem:[%s1633 + $0x50] sm:$0xff]
      %v1642 = vld [vmem:[%s1633 + $0x60] sm:$0xff]
      %v1643 = vld [vmem:[%s1633 + $0x68] sm:$0xff]
      %v1644 = vld [vmem:[%s1633 + $0x78] sm:$0xff]
      %v1645 = vld [vmem:[%s1633 + $0x80] sm:$0xff]
      %v1646 = vld [vmem:[%s1633 + $0x90] sm:$0xff]
      %v1647 = vld [vmem:[%s1633 + $0x98] sm:$0xff]
      %v1648 = vld [vmem:[%s1633 + $0xa8] sm:$0xff]
      %v1649 = vld [vmem:[%s1633 + $0xb0] sm:$0xff]
      %v1650 = vmul.f32 %v1634, %v1000
      %v1651 = vmul.f32 %v1635, %v1000
      %v1652 = vmul.f32 %v1636, %v1000
      %v1653 = vmul.f32 %v1637, %v1000
      %v1654 = vmul.f32 %v1638, %v1000
      %v1655 = vmul.f32 %v1639, %v1000
      %v1656 = vmul.f32 %v1640, %v1000
      %v1657 = vmul.f32 %v1641, %v1000
      %v1658 = vmul.f32 %v1642, %v1000
      %v1659 = vmul.f32 %v1643, %v1000
      %v1660 = vmul.f32 %v1644, %v1000
      %v1661 = vmul.f32 %v1645, %v1000
      %v1662 = vmul.f32 %v1646, %v1000
      %v1663 = vmul.f32 %v1647, %v1000
      %v1664 = vmul.f32 %v1648, %v1000
      %v1665 = vmul.f32 %v1649, %v1000
      %v1666 = vadd.f32 %v1650, 0.0
      %v1667 = vadd.f32 %v1651, 0.0
      %v1668 = vadd.f32 %v1652, 0.0
      %v1669 = vadd.f32 %v1653, 0.0
      %v1670 = vadd.f32 %v1654, 0.0
      %v1671 = vadd.f32 %v1655, 0.0
      %v1672 = vadd.f32 %v1656, 0.0
      %v1673 = vadd.f32 %v1657, 0.0
      %v1674 = vadd.f32 %v1658, 0.0
      %v1675 = vadd.f32 %v1659, 0.0
      %v1676 = vadd.f32 %v1660, 0.0
      %v1677 = vadd.f32 %v1661, 0.0
      %v1678 = vadd.f32 %v1662, 0.0
      %v1679 = vadd.f32 %v1663, 0.0
      %v1680 = vadd.f32 %v1664, 0.0
      %v1681 = vadd.f32 %v1665, 0.0
      %v1682 = vld [vmem:[%s1633 + $0x1] sm:$0xff]
      %v1683 = vld [vmem:[%s1633 + $0x9] sm:$0xff]
      %v1684 = vld [vmem:[%s1633 + $0x19] sm:$0xff]
      %v1685 = vld [vmem:[%s1633 + $0x21] sm:$0xff]
      %v1686 = vld [vmem:[%s1633 + $0x31] sm:$0xff]
      %v1687 = vld [vmem:[%s1633 + $0x39] sm:$0xff]
      %v1688 = vld [vmem:[%s1633 + $0x49] sm:$0xff]
      %v1689 = vld [vmem:[%s1633 + $0x51] sm:$0xff]
      %v1690 = vld [vmem:[%s1633 + $0x61] sm:$0xff]
      %v1691 = vld [vmem:[%s1633 + $0x69] sm:$0xff]
      %v1692 = vld [vmem:[%s1633 + $0x79] sm:$0xff]
      %v1693 = vld [vmem:[%s1633 + $0x81] sm:$0xff]
      %v1694 = vld [vmem:[%s1633 + $0x91] sm:$0xff]
      %v1695 = vld [vmem:[%s1633 + $0x99] sm:$0xff]
      %v1696 = vld [vmem:[%s1633 + $0xa9] sm:$0xff]
      %v1697 = vld [vmem:[%s1633 + $0xb1] sm:$0xff]
      %v1698 = vmul.f32 %v1682, %v1052
      %v1699 = vmul.f32 %v1683, %v1052
      %v1700 = vmul.f32 %v1684, %v1052
      %v1701 = vmul.f32 %v1685, %v1052
      %v1702 = vmul.f32 %v1686, %v1052
      %v1703 = vmul.f32 %v1687, %v1052
      %v1704 = vmul.f32 %v1688, %v1052
      %v1705 = vmul.f32 %v1689, %v1052
      %v1706 = vmul.f32 %v1690, %v1052
      %v1707 = vmul.f32 %v1691, %v1052
      %v1708 = vmul.f32 %v1692, %v1052
      %v1709 = vmul.f32 %v1693, %v1052
      %v1710 = vmul.f32 %v1694, %v1052
      %v1711 = vmul.f32 %v1695, %v1052
      %v1712 = vmul.f32 %v1696, %v1052
      %v1713 = vmul.f32 %v1697, %v1052
      %v1714 = vadd.f32 %v1666, %v1698
      %v1715 = vadd.f32 %v1667, %v1699
      %v1716 = vadd.f32 %v1668, %v1700
      %v1717 = vadd.f32 %v1669, %v1701
      %v1718 = vadd.f32 %v1670, %v1702
      %v1719 = vadd.f32 %v1671, %v1703
      %v1720 = vadd.f32 %v1672, %v1704
      %v1721 = vadd.f32 %v1673, %v1705
      %v1722 = vadd.f32 %v1674, %v1706
      %v1723 = vadd.f32 %v1675, %v1707
      %v1724 = vadd.f32 %v1676, %v1708
      %v1725 = vadd.f32 %v1677, %v1709
      %v1726 = vadd.f32 %v1678, %v1710
      %v1727 = vadd.f32 %v1679, %v1711
      %v1728 = vadd.f32 %v1680, %v1712
      %v1729 = vadd.f32 %v1681, %v1713
      %v1730 = vld [vmem:[%s1633 + $0x2] sm:$0xff]
      %v1731 = vld [vmem:[%s1633 + $0xa] sm:$0xff]
      %v1732 = vld [vmem:[%s1633 + $0x1a] sm:$0xff]
      %v1733 = vld [vmem:[%s1633 + $0x22] sm:$0xff]
      %v1734 = vld [vmem:[%s1633 + $0x32] sm:$0xff]
      %v1735 = vld [vmem:[%s1633 + $0x3a] sm:$0xff]
      %v1736 = vld [vmem:[%s1633 + $0x4a] sm:$0xff]
      %v1737 = vld [vmem:[%s1633 + $0x52] sm:$0xff]
      %v1738 = vld [vmem:[%s1633 + $0x62] sm:$0xff]
      %v1739 = vld [vmem:[%s1633 + $0x6a] sm:$0xff]
      %v1740 = vld [vmem:[%s1633 + $0x7a] sm:$0xff]
      %v1741 = vld [vmem:[%s1633 + $0x82] sm:$0xff]
      %v1742 = vld [vmem:[%s1633 + $0x92] sm:$0xff]
      %v1743 = vld [vmem:[%s1633 + $0x9a] sm:$0xff]
      %v1744 = vld [vmem:[%s1633 + $0xaa] sm:$0xff]
      %v1745 = vld [vmem:[%s1633 + $0xb2] sm:$0xff]
      %v1746 = vmul.f32 %v1730, %v1104
      %v1747 = vmul.f32 %v1731, %v1104
      %v1748 = vmul.f32 %v1732, %v1104
      %v1749 = vmul.f32 %v1733, %v1104
      %v1750 = vmul.f32 %v1734, %v1104
      %v1751 = vmul.f32 %v1735, %v1104
      %v1752 = vmul.f32 %v1736, %v1104
      %v1753 = vmul.f32 %v1737, %v1104
      %v1754 = vmul.f32 %v1738, %v1104
      %v1755 = vmul.f32 %v1739, %v1104
      %v1756 = vmul.f32 %v1740, %v1104
      %v1757 = vmul.f32 %v1741, %v1104
      %v1758 = vmul.f32 %v1742, %v1104
      %v1759 = vmul.f32 %v1743, %v1104
      %v1760 = vmul.f32 %v1744, %v1104
      %v1761 = vmul.f32 %v1745, %v1104
      %v1762 = vadd.f32 %v1714, %v1746
      %v1763 = vadd.f32 %v1715, %v1747
      %v1764 = vadd.f32 %v1716, %v1748
      %v1765 = vadd.f32 %v1717, %v1749
      %v1766 = vadd.f32 %v1718, %v1750
      %v1767 = vadd.f32 %v1719, %v1751
      %v1768 = vadd.f32 %v1720, %v1752
      %v1769 = vadd.f32 %v1721, %v1753
      %v1770 = vadd.f32 %v1722, %v1754
      %v1771 = vadd.f32 %v1723, %v1755
      %v1772 = vadd.f32 %v1724, %v1756
      %v1773 = vadd.f32 %v1725, %v1757
      %v1774 = vadd.f32 %v1726, %v1758
      %v1775 = vadd.f32 %v1727, %v1759
      %v1776 = vadd.f32 %v1728, %v1760
      %v1777 = vadd.f32 %v1729, %v1761
      %s1778 = scalar_lea.vmem [#allocation2], 216
      %v1779 = vld [vmem:[%s1778] sm:$0xff]
      %v1780 = vld [vmem:[%s1778 + $0x8] sm:$0xff]
      %v1781 = vld [vmem:[%s1778 + $0x18] sm:$0xff]
      %v1782 = vld [vmem:[%s1778 + $0x20] sm:$0xff]
      %v1783 = vld [vmem:[%s1778 + $0x30] sm:$0xff]
      %v1784 = vld [vmem:[%s1778 + $0x38] sm:$0xff]
      %v1785 = vld [vmem:[%s1778 + $0x48] sm:$0xff]
      %v1786 = vld [vmem:[%s1778 + $0x50] sm:$0xff]
      %v1787 = vld [vmem:[%s1778 + $0x60] sm:$0xff]
      %v1788 = vld [vmem:[%s1778 + $0x68] sm:$0xff]
      %v1789 = vld [vmem:[%s1778 + $0x78] sm:$0xff]
      %v1790 = vld [vmem:[%s1778 + $0x80] sm:$0xff]
      %v1791 = vld [vmem:[%s1778 + $0x90] sm:$0xff]
      %v1792 = vld [vmem:[%s1778 + $0x98] sm:$0xff]
      %v1793 = vld [vmem:[%s1778 + $0xa8] sm:$0xff]
      %v1794 = vld [vmem:[%s1778 + $0xb0] sm:$0xff]
      %v1795 = vmul.f32 %v1779, %v1156
      %v1796 = vmul.f32 %v1780, %v1156
      %v1797 = vmul.f32 %v1781, %v1156
      %v1798 = vmul.f32 %v1782, %v1156
      %v1799 = vmul.f32 %v1783, %v1156
      %v1800 = vmul.f32 %v1784, %v1156
      %v1801 = vmul.f32 %v1785, %v1156
      %v1802 = vmul.f32 %v1786, %v1156
      %v1803 = vmul.f32 %v1787, %v1156
      %v1804 = vmul.f32 %v1788, %v1156
      %v1805 = vmul.f32 %v1789, %v1156
      %v1806 = vmul.f32 %v1790, %v1156
      %v1807 = vmul.f32 %v1791, %v1156
      %v1808 = vmul.f32 %v1792, %v1156
      %v1809 = vmul.f32 %v1793, %v1156
      %v1810 = vmul.f32 %v1794, %v1156
      %v1811 = vadd.f32 %v1762, %v1795
      %v1812 = vadd.f32 %v1763, %v1796
      %v1813 = vadd.f32 %v1764, %v1797
      %v1814 = vadd.f32 %v1765, %v1798
      %v1815 = vadd.f32 %v1766, %v1799
      %v1816 = vadd.f32 %v1767, %v1800
      %v1817 = vadd.f32 %v1768, %v1801
      %v1818 = vadd.f32 %v1769, %v1802
      %v1819 = vadd.f32 %v1770, %v1803
      %v1820 = vadd.f32 %v1771, %v1804
      %v1821 = vadd.f32 %v1772, %v1805
      %v1822 = vadd.f32 %v1773, %v1806
      %v1823 = vadd.f32 %v1774, %v1807
      %v1824 = vadd.f32 %v1775, %v1808
      %v1825 = vadd.f32 %v1776, %v1809
      %v1826 = vadd.f32 %v1777, %v1810
      %v1827 = vld [vmem:[%s1778 + $0x1] sm:$0xff]
      %v1828 = vld [vmem:[%s1778 + $0x9] sm:$0xff]
      %v1829 = vld [vmem:[%s1778 + $0x19] sm:$0xff]
      %v1830 = vld [vmem:[%s1778 + $0x21] sm:$0xff]
      %v1831 = vld [vmem:[%s1778 + $0x31] sm:$0xff]
      %v1832 = vld [vmem:[%s1778 + $0x39] sm:$0xff]
      %v1833 = vld [vmem:[%s1778 + $0x49] sm:$0xff]
      %v1834 = vld [vmem:[%s1778 + $0x51] sm:$0xff]
      %v1835 = vld [vmem:[%s1778 + $0x61] sm:$0xff]
      %v1836 = vld [vmem:[%s1778 + $0x69] sm:$0xff]
      %v1837 = vld [vmem:[%s1778 + $0x79] sm:$0xff]
      %v1838 = vld [vmem:[%s1778 + $0x81] sm:$0xff]
      %v1839 = vld [vmem:[%s1778 + $0x91] sm:$0xff]
      %v1840 = vld [vmem:[%s1778 + $0x99] sm:$0xff]
      %v1841 = vld [vmem:[%s1778 + $0xa9] sm:$0xff]
      %v1842 = vld [vmem:[%s1778 + $0xb1] sm:$0xff]
      %v1843 = vmul.f32 %v1827, %v1208
      %v1844 = vmul.f32 %v1828, %v1208
      %v1845 = vmul.f32 %v1829, %v1208
      %v1846 = vmul.f32 %v1830, %v1208
      %v1847 = vmul.f32 %v1831, %v1208
      %v1848 = vmul.f32 %v1832, %v1208
      %v1849 = vmul.f32 %v1833, %v1208
      %v1850 = vmul.f32 %v1834, %v1208
      %v1851 = vmul.f32 %v1835, %v1208
      %v1852 = vmul.f32 %v1836, %v1208
      %v1853 = vmul.f32 %v1837, %v1208
      %v1854 = vmul.f32 %v1838, %v1208
      %v1855 = vmul.f32 %v1839, %v1208
      %v1856 = vmul.f32 %v1840, %v1208
      %v1857 = vmul.f32 %v1841, %v1208
      %v1858 = vmul.f32 %v1842, %v1208
      %v1859 = vadd.f32 %v1811, %v1843
      %v1860 = vadd.f32 %v1812, %v1844
      %v1861 = vadd.f32 %v1813, %v1845
      %v1862 = vadd.f32 %v1814, %v1846
      %v1863 = vadd.f32 %v1815, %v1847
      %v1864 = vadd.f32 %v1816, %v1848
      %v1865 = vadd.f32 %v1817, %v1849
      %v1866 = vadd.f32 %v1818, %v1850
      %v1867 = vadd.f32 %v1819, %v1851
      %v1868 = vadd.f32 %v1820, %v1852
      %v1869 = vadd.f32 %v1821, %v1853
      %v1870 = vadd.f32 %v1822, %v1854
      %v1871 = vadd.f32 %v1823, %v1855
      %v1872 = vadd.f32 %v1824, %v1856
      %v1873 = vadd.f32 %v1825, %v1857
      %v1874 = vadd.f32 %v1826, %v1858
      %v1875 = vld [vmem:[%s1778 + $0x2] sm:$0xff]
      %v1876 = vld [vmem:[%s1778 + $0xa] sm:$0xff]
      %v1877 = vld [vmem:[%s1778 + $0x1a] sm:$0xff]
      %v1878 = vld [vmem:[%s1778 + $0x22] sm:$0xff]
      %v1879 = vld [vmem:[%s1778 + $0x32] sm:$0xff]
      %v1880 = vld [vmem:[%s1778 + $0x3a] sm:$0xff]
      %v1881 = vld [vmem:[%s1778 + $0x4a] sm:$0xff]
      %v1882 = vld [vmem:[%s1778 + $0x52] sm:$0xff]
      %v1883 = vld [vmem:[%s1778 + $0x62] sm:$0xff]
      %v1884 = vld [vmem:[%s1778 + $0x6a] sm:$0xff]
      %v1885 = vld [vmem:[%s1778 + $0x7a] sm:$0xff]
      %v1886 = vld [vmem:[%s1778 + $0x82] sm:$0xff]
      %v1887 = vld [vmem:[%s1778 + $0x92] sm:$0xff]
      %v1888 = vld [vmem:[%s1778 + $0x9a] sm:$0xff]
      %v1889 = vld [vmem:[%s1778 + $0xaa] sm:$0xff]
      %v1890 = vld [vmem:[%s1778 + $0xb2] sm:$0xff]
      %v1891 = vmul.f32 %v1875, %v1260
      %v1892 = vmul.f32 %v1876, %v1260
      %v1893 = vmul.f32 %v1877, %v1260
      %v1894 = vmul.f32 %v1878, %v1260
      %v1895 = vmul.f32 %v1879, %v1260
      %v1896 = vmul.f32 %v1880, %v1260
      %v1897 = vmul.f32 %v1881, %v1260
      %v1898 = vmul.f32 %v1882, %v1260
      %v1899 = vmul.f32 %v1883, %v1260
      %v1900 = vmul.f32 %v1884, %v1260
      %v1901 = vmul.f32 %v1885, %v1260
      %v1902 = vmul.f32 %v1886, %v1260
      %v1903 = vmul.f32 %v1887, %v1260
      %v1904 = vmul.f32 %v1888, %v1260
      %v1905 = vmul.f32 %v1889, %v1260
      %v1906 = vmul.f32 %v1890, %v1260
      %v1907 = vadd.f32 %v1859, %v1891
      %v1908 = vadd.f32 %v1860, %v1892
      %v1909 = vadd.f32 %v1861, %v1893
      %v1910 = vadd.f32 %v1862, %v1894
      %v1911 = vadd.f32 %v1863, %v1895
      %v1912 = vadd.f32 %v1864, %v1896
      %v1913 = vadd.f32 %v1865, %v1897
      %v1914 = vadd.f32 %v1866, %v1898
      %v1915 = vadd.f32 %v1867, %v1899
      %v1916 = vadd.f32 %v1868, %v1900
      %v1917 = vadd.f32 %v1869, %v1901
      %v1918 = vadd.f32 %v1870, %v1902
      %v1919 = vadd.f32 %v1871, %v1903
      %v1920 = vadd.f32 %v1872, %v1904
      %v1921 = vadd.f32 %v1873, %v1905
      %v1922 = vadd.f32 %v1874, %v1906
      %s1923 = scalar_lea.vmem [#allocation2], 240
      %v1924 = vld [vmem:[%s1923] sm:$0xff]
      %v1925 = vld [vmem:[%s1923 + $0x8] sm:$0xff]
      %v1926 = vld [vmem:[%s1923 + $0x18] sm:$0xff]
      %v1927 = vld [vmem:[%s1923 + $0x20] sm:$0xff]
      %v1928 = vld [vmem:[%s1923 + $0x30] sm:$0xff]
      %v1929 = vld [vmem:[%s1923 + $0x38] sm:$0xff]
      %v1930 = vld [vmem:[%s1923 + $0x48] sm:$0xff]
      %v1931 = vld [vmem:[%s1923 + $0x50] sm:$0xff]
      %v1932 = vld [vmem:[%s1923 + $0x60] sm:$0xff]
      %v1933 = vld [vmem:[%s1923 + $0x68] sm:$0xff]
      %v1934 = vld [vmem:[%s1923 + $0x78] sm:$0xff]
      %v1935 = vld [vmem:[%s1923 + $0x80] sm:$0xff]
      %v1936 = vld [vmem:[%s1923 + $0x90] sm:$0xff]
      %v1937 = vld [vmem:[%s1923 + $0x98] sm:$0xff]
      %v1938 = vld [vmem:[%s1923 + $0xa8] sm:$0xff]
      %v1939 = vld [vmem:[%s1923 + $0xb0] sm:$0xff]
      %v1940 = vmul.f32 %v1924, %v1313
      %v1941 = vmul.f32 %v1925, %v1313
      %v1942 = vmul.f32 %v1926, %v1313
      %v1943 = vmul.f32 %v1927, %v1313
      %v1944 = vmul.f32 %v1928, %v1313
      %v1945 = vmul.f32 %v1929, %v1313
      %v1946 = vmul.f32 %v1930, %v1313
      %v1947 = vmul.f32 %v1931, %v1313
      %v1948 = vmul.f32 %v1932, %v1313
      %v1949 = vmul.f32 %v1933, %v1313
      %v1950 = vmul.f32 %v1934, %v1313
      %v1951 = vmul.f32 %v1935, %v1313
      %v1952 = vmul.f32 %v1936, %v1313
      %v1953 = vmul.f32 %v1937, %v1313
      %v1954 = vmul.f32 %v1938, %v1313
      %v1955 = vmul.f32 %v1939, %v1313
      %v1956 = vadd.f32 %v1907, %v1940
      %v1957 = vadd.f32 %v1908, %v1941
      %v1958 = vadd.f32 %v1909, %v1942
      %v1959 = vadd.f32 %v1910, %v1943
      %v1960 = vadd.f32 %v1911, %v1944
      %v1961 = vadd.f32 %v1912, %v1945
      %v1962 = vadd.f32 %v1913, %v1946
      %v1963 = vadd.f32 %v1914, %v1947
      %v1964 = vadd.f32 %v1915, %v1948
      %v1965 = vadd.f32 %v1916, %v1949
      %v1966 = vadd.f32 %v1917, %v1950
      %v1967 = vadd.f32 %v1918, %v1951
      %v1968 = vadd.f32 %v1919, %v1952
      %v1969 = vadd.f32 %v1920, %v1953
      %v1970 = vadd.f32 %v1921, %v1954
      %v1971 = vadd.f32 %v1922, %v1955
      %v1972 = vld [vmem:[%s1923 + $0x1] sm:$0xff]
      %v1973 = vld [vmem:[%s1923 + $0x9] sm:$0xff]
      %v1974 = vld [vmem:[%s1923 + $0x19] sm:$0xff]
      %v1975 = vld [vmem:[%s1923 + $0x21] sm:$0xff]
      %v1976 = vld [vmem:[%s1923 + $0x31] sm:$0xff]
      %v1977 = vld [vmem:[%s1923 + $0x39] sm:$0xff]
      %v1978 = vld [vmem:[%s1923 + $0x49] sm:$0xff]
      %v1979 = vld [vmem:[%s1923 + $0x51] sm:$0xff]
      %v1980 = vld [vmem:[%s1923 + $0x61] sm:$0xff]
      %v1981 = vld [vmem:[%s1923 + $0x69] sm:$0xff]
      %v1982 = vld [vmem:[%s1923 + $0x79] sm:$0xff]
      %v1983 = vld [vmem:[%s1923 + $0x81] sm:$0xff]
      %v1984 = vld [vmem:[%s1923 + $0x91] sm:$0xff]
      %v1985 = vld [vmem:[%s1923 + $0x99] sm:$0xff]
      %v1986 = vld [vmem:[%s1923 + $0xa9] sm:$0xff]
      %v1987 = vld [vmem:[%s1923 + $0xb1] sm:$0xff]
      %v1988 = vmul.f32 %v1972, %v1365
      %v1989 = vmul.f32 %v1973, %v1365
      %v1990 = vmul.f32 %v1974, %v1365
      %v1991 = vmul.f32 %v1975, %v1365
      %v1992 = vmul.f32 %v1976, %v1365
      %v1993 = vmul.f32 %v1977, %v1365
      %v1994 = vmul.f32 %v1978, %v1365
      %v1995 = vmul.f32 %v1979, %v1365
      %v1996 = vmul.f32 %v1980, %v1365
      %v1997 = vmul.f32 %v1981, %v1365
      %v1998 = vmul.f32 %v1982, %v1365
      %v1999 = vmul.f32 %v1983, %v1365
      %v2000 = vmul.f32 %v1984, %v1365
      %v2001 = vmul.f32 %v1985, %v1365
      %v2002 = vmul.f32 %v1986, %v1365
      %v2003 = vmul.f32 %v1987, %v1365
      %v2004 = vadd.f32 %v1956, %v1988
      %v2005 = vadd.f32 %v1957, %v1989
      %v2006 = vadd.f32 %v1958, %v1990
      %v2007 = vadd.f32 %v1959, %v1991
      %v2008 = vadd.f32 %v1960, %v1992
      %v2009 = vadd.f32 %v1961, %v1993
      %v2010 = vadd.f32 %v1962, %v1994
      %v2011 = vadd.f32 %v1963, %v1995
      %v2012 = vadd.f32 %v1964, %v1996
      %v2013 = vadd.f32 %v1965, %v1997
      %v2014 = vadd.f32 %v1966, %v1998
      %v2015 = vadd.f32 %v1967, %v1999
      %v2016 = vadd.f32 %v1968, %v2000
      %v2017 = vadd.f32 %v1969, %v2001
      %v2018 = vadd.f32 %v1970, %v2002
      %v2019 = vadd.f32 %v1971, %v2003
      %v2020 = vld [vmem:[%s1923 + $0x2] sm:$0xff]
      %v2021 = vld [vmem:[%s1923 + $0xa] sm:$0xff]
      %v2022 = vld [vmem:[%s1923 + $0x1a] sm:$0xff]
      %v2023 = vld [vmem:[%s1923 + $0x22] sm:$0xff]
      %v2024 = vld [vmem:[%s1923 + $0x32] sm:$0xff]
      %v2025 = vld [vmem:[%s1923 + $0x3a] sm:$0xff]
      %v2026 = vld [vmem:[%s1923 + $0x4a] sm:$0xff]
      %v2027 = vld [vmem:[%s1923 + $0x52] sm:$0xff]
      %v2028 = vld [vmem:[%s1923 + $0x62] sm:$0xff]
      %v2029 = vld [vmem:[%s1923 + $0x6a] sm:$0xff]
      %v2030 = vld [vmem:[%s1923 + $0x7a] sm:$0xff]
      %v2031 = vld [vmem:[%s1923 + $0x82] sm:$0xff]
      %v2032 = vld [vmem:[%s1923 + $0x92] sm:$0xff]
      %v2033 = vld [vmem:[%s1923 + $0x9a] sm:$0xff]
      %v2034 = vld [vmem:[%s1923 + $0xaa] sm:$0xff]
      %v2035 = vld [vmem:[%s1923 + $0xb2] sm:$0xff]
      %v2036 = vmul.f32 %v2020, %v1417
      %v2037 = vmul.f32 %v2021, %v1417
      %v2038 = vmul.f32 %v2022, %v1417
      %v2039 = vmul.f32 %v2023, %v1417
      %v2040 = vmul.f32 %v2024, %v1417
      %v2041 = vmul.f32 %v2025, %v1417
      %v2042 = vmul.f32 %v2026, %v1417
      %v2043 = vmul.f32 %v2027, %v1417
      %v2044 = vmul.f32 %v2028, %v1417
      %v2045 = vmul.f32 %v2029, %v1417
      %v2046 = vmul.f32 %v2030, %v1417
      %v2047 = vmul.f32 %v2031, %v1417
      %v2048 = vmul.f32 %v2032, %v1417
      %v2049 = vmul.f32 %v2033, %v1417
      %v2050 = vmul.f32 %v2034, %v1417
      %v2051 = vmul.f32 %v2035, %v1417
      %v2052 = vadd.f32 %v2004, %v2036
      %v2053 = vadd.f32 %v2005, %v2037
      %v2054 = vadd.f32 %v2006, %v2038
      %v2055 = vadd.f32 %v2007, %v2039
      %v2056 = vadd.f32 %v2008, %v2040
      %v2057 = vadd.f32 %v2009, %v2041
      %v2058 = vadd.f32 %v2010, %v2042
      %v2059 = vadd.f32 %v2011, %v2043
      %v2060 = vadd.f32 %v2012, %v2044
      %v2061 = vadd.f32 %v2013, %v2045
      %v2062 = vadd.f32 %v2014, %v2046
      %v2063 = vadd.f32 %v2015, %v2047
      %v2064 = vadd.f32 %v2016, %v2048
      %v2065 = vadd.f32 %v2017, %v2049
      %v2066 = vadd.f32 %v2018, %v2050
      %v2067 = vadd.f32 %v2019, %v2051
      %v2068 = vadd.f32 %v2052, %v1454
      %v2069 = vadd.f32 %v2053, %v1454
      %v2070 = vadd.f32 %v2054, %v1454
      %v2071 = vadd.f32 %v2055, %v1454
      %v2072 = vadd.f32 %v2056, %v1454
      %v2073 = vadd.f32 %v2057, %v1454
      %v2074 = vadd.f32 %v2058, %v1454
      %v2075 = vadd.f32 %v2059, %v1454
      %v2076 = vadd.f32 %v2060, %v1454
      %v2077 = vadd.f32 %v2061, %v1454
      %v2078 = vadd.f32 %v2062, %v1454
      %v2079 = vadd.f32 %v2063, %v1454
      %v2080 = vadd.f32 %v2064, %v1454
      %v2081 = vadd.f32 %v2065, %v1454
      %v2082 = vadd.f32 %v2066, %v1454
      %v2083 = vadd.f32 %v2067, %v1454
      %v2084 = vmax.f32 %v2068, 0.0
      %v2085 = vmax.f32 %v2069, 0.0
      %v2086 = vmax.f32 %v2070, 0.0
      %v2087 = vmax.f32 %v2071, 0.0
      %v2088 = vmax.f32 %v2072, 0.0
      %v2089 = vmax.f32 %v2073, 0.0
      %v2090 = vmax.f32 %v2074, 0.0
      %v2091 = vmax.f32 %v2075, 0.0
      %v2092 = vmax.f32 %v2076, 0.0
      %v2093 = vmax.f32 %v2077, 0.0
      %v2094 = vmax.f32 %v2078, 0.0
      %v2095 = vmax.f32 %v2079, 0.0
      %v2096 = vmax.f32 %v2080, 0.0
      %v2097 = vmax.f32 %v2081, 0.0
      %v2098 = vmax.f32 %v2082, 0.0
      %v2099 = vmax.f32 %v2083, 0.0
      %v2100 = vmin.f32 %v2084, 6.0
      %v2101 = vmin.f32 %v2085, 6.0
      %v2102 = vmin.f32 %v2086, 6.0
      %v2103 = vmin.f32 %v2087, 6.0
      %v2104 = vmin.f32 %v2088, 6.0
      %v2105 = vmin.f32 %v2089, 6.0
      %v2106 = vmin.f32 %v2090, 6.0
      %v2107 = vmin.f32 %v2091, 6.0
      %v2108 = vmin.f32 %v2092, 6.0
      %v2109 = vmin.f32 %v2093, 6.0
      %v2110 = vmin.f32 %v2094, 6.0
      %v2111 = vmin.f32 %v2095, 6.0
      %v2112 = vmin.f32 %v2096, 6.0
      %v2113 = vmin.f32 %v2097, 6.0
      %v2114 = vmin.f32 %v2098, 6.0
      %v2115 = vmin.f32 %v2099, 6.0
      %v2117 = vsel %vm756, %v2100, 0
      %v2120 = vsel %vm756, %v2101, 0
      %v2123 = vsel %vm756, %v2102, 0
      %v2126 = vsel %vm756, %v2103, 0
      %v2129 = vsel %vm756, %v2104, 0
      %v2132 = vsel %vm756, %v2105, 0
      %v2135 = vsel %vm756, %v2106, 0
      %v2138 = vsel %vm756, %v2107, 0
      %v2141 = vsel %vm756, %v2108, 0
      %v2144 = vsel %vm756, %v2109, 0
      %v2147 = vsel %vm756, %v2110, 0
      %v2150 = vsel %vm756, %v2111, 0
      %v2153 = vsel %vm756, %v2112, 0
      %v2156 = vsel %vm756, %v2113, 0
      %v2159 = vsel %vm756, %v2114, 0
      %v2162 = vsel %vm756, %v2115, 0
      %2164 = vmatprep.subr.mxu0 0.0
      %2165 = vmatpush1.xpose.msra.mxu0 %v2117
      %2166 = vmatprep.subr.mxu0 0.0
      %2167 = vmatpush1.xpose.msra.mxu0 %v2120
      %2168 = vmatprep.subr.mxu0 0.0
      %2169 = vmatpush1.xpose.msra.mxu0 %v2123
      %2170 = vmatprep.subr.mxu0 0.0
      %2171 = vmatpush1.xpose.msra.mxu0 %v2126
      %2172 = vmatprep.subr.mxu0 0.0
      %2173 = vmatpush1.xpose.msra.mxu0 %v2129
      %2174 = vmatprep.subr.mxu0 0.0
      %2175 = vmatpush1.xpose.msra.mxu0 %v2132
      %2176 = vmatprep.subr.mxu0 0.0
      %2177 = vmatpush1.xpose.msra.mxu0 %v2135
      %2178 = vmatprep.subr.mxu0 0.0
      %2179 = vmatpush1.xpose.msra.mxu0 %v2138
      %2180 = vmatprep.subr.mxu0 0.0
      %2181 = vmatpush1.xpose.msra.mxu0 %v2141
      %2182 = vmatprep.subr.mxu0 0.0
      %2183 = vmatpush1.xpose.msra.mxu0 %v2144
      %2184 = vmatprep.subr.mxu0 0.0
      %2185 = vmatpush1.xpose.msra.mxu0 %v2147
      %2186 = vmatprep.subr.mxu0 0.0
      %2187 = vmatpush1.xpose.msra.mxu0 %v2150
      %2188 = vmatprep.subr.mxu0 0.0
      %2189 = vmatpush1.xpose.msra.mxu0 %v2153
      %2190 = vmatprep.subr.mxu0 0.0
      %2191 = vmatpush1.xpose.msra.mxu0 %v2156
      %2192 = vmatprep.subr.mxu0 0.0
      %2193 = vmatpush1.xpose.msra.mxu0 %v2159
      %2194 = vmatprep.subr.mxu0 0.0
      %2195 = vmatpush1.xpose.msra.mxu0 %v2162
      %2196 = vmatprep.subr.mxu0 0.0
      %2197 = vmatpush1.xpose.msra.mxu0 0.0
      %2198 = vmatprep.subr.mxu0 0.0
      %2199 = vmatpush1.xpose.msra.mxu0 0.0
      %2200 = vmatprep.subr.mxu0 0.0
      %2201 = vmatpush1.xpose.msra.mxu0 0.0
      %2202 = vmatprep.subr.mxu0 0.0
      %2203 = vmatpush1.xpose.msra.mxu0 0.0
      %2204 = vmatprep.subr.mxu0 0.0
      %2205 = vmatpush1.xpose.msra.mxu0 0.0
      %2206 = vmatprep.subr.mxu0 0.0
      %2207 = vmatpush1.xpose.msra.mxu0 0.0
      %2208 = vmatprep.subr.mxu0 0.0
      %2209 = vmatpush1.xpose.msra.mxu0 0.0
      %2210 = vmatprep.subr.mxu0 0.0
      %2211 = vmatpush1.xpose.msra.mxu0 0.0
      %2212 = vmatprep.subr.mxu0 0.0
      %2213 = vmatpush1.xpose.msra.mxu0 0.0
      %2214 = vmatprep.subr.mxu0 0.0
      %2215 = vmatpush1.xpose.msra.mxu0 0.0
      %2216 = vmatprep.subr.mxu0 0.0
      %2217 = vmatpush1.xpose.msra.mxu0 0.0
      %2218 = vmatprep.subr.mxu0 0.0
      %2219 = vmatpush1.xpose.msra.mxu0 0.0
      %2220 = vmatprep.subr.mxu0 0.0
      %2221 = vmatpush1.xpose.msra.mxu0 0.0
      %2222 = vmatprep.subr.mxu0 0.0
      %2223 = vmatpush1.xpose.msra.mxu0 0.0
      %2224 = vmatprep.subr.mxu0 0.0
      %2225 = vmatpush1.xpose.msra.mxu0 0.0
      %2226 = vmatprep.subr.mxu0 0.0
      %2227 = vmatpush1.xpose.msra.mxu0 0.0
      %2228 = vmatprep.mubr.f32.mxu0 0.0
      %2229 = vmatmul.mubr.f32.gmra.mrb[0].mxu0 %v1510
      %v2230 = vpop.f32.mrb[0].mxu0
      %v2231 = vadd.f32 %v1507, %v2230
      %v2232 = vpop.f32.mrb[0].mxu0
      %2233 = vdwg.mxu0
      %v2234 = vld [vmem:[%s320 + $0x4] sm:$0xf]
      %v2235 = vadd.f32 %v2231, %v2234
      %2236 = vst [vmem:[%s325 + $0x4] sm:$0xf] %v2235
      %p2237 = scmp.lt.s32.totalorder %s19, 1
      %s2238 = scalar_select %p2237, %s19, 1
      %s2239 = smul.addr %s2238, 2
      %s2240 = smul.addr %s2239, 4
      %s2241 = scalar_lea.vmem %s8, %s2240
      // Predicated region
      $region53: #{base_block_forward.1} parent=51 // pred_check
        %p2242 = pneg %p215
      $region54: #{base_block_forward.1} parent=51 // pred_check_branch
        %2244 = sbr.rel (%p2242) target = $region56
      $region55: #{base_block_forward.1} parent=51 // pred_region
        _
      $region56: #{base_block_forward.1} parent=51 // pred_fallthru
        _
    $region52: #{base_block_forward.1} parent=5 // pred_fallthru
      _
    %p2245 = scmp.le.s32.totalorder 2, %s14
    // Predicated region
    $region57: #{base_block_forward.1} parent=5 // pred_check
      %p2246 = pneg %p2245
    $region58: #{base_block_forward.1} parent=5 // pred_check_branch
      %2248 = sbr.rel (%p2246) target = $region60
    $region59: #{base_block_forward.1} parent=5 // pred_region
      %s2249 = ssub.s32 %s14, 2
      // Predicated region
      $region61: #{base_block_forward.1} parent=59 // pred_check
        %p2250 = pneg %p221
      $region62: #{base_block_forward.1} parent=59 // pred_check_branch
        %2252 = sbr.rel (%p2250) target = $region64
      $region63: #{base_block_forward.1} parent=59 // pred_region
        %p2253 = scmp.lt.s32.totalorder %s20, 1
        %s2254 = scalar_select %p2253, %s20, 1
        %s2255 = smul.addr %s2254, 2
        %s2256 = smul.addr %s2255, 4
        %s2257 = scalar_lea.vmem %s8, %s2256
      $region64: #{base_block_forward.1} parent=59 // pred_fallthru
        _
    $region60: #{base_block_forward.1} parent=5 // pred_fallthru
      _
  $region6: #{base_block_forward.1} parent=0 // loop_footer
    %s18 = sadd.s32 1, %s14
  $region7: #{base_block_forward.1} parent=0 // loop_footer_branch
    %13 = sbr.rel target = $region3
  $region8: #{base_block_forward.1} parent=0 // loop_exit
    _

</llo_original>
